<compile_context>
chip_gen: v7x
topology: tpu7x:2x2x1
jax: 0.10.0
libtpu: 0.0.40
codegen_flags: <defaults>
</compile_context>

<pallas_src>
import math
from functools import partial

import jax
import jax.numpy as jnp
from jax import lax
from jax.experimental import pallas as pl
from jax.experimental.pallas import tpu as pltpu

# Flip to jnp.bfloat16 on v6e/v7x for ~2-4x MXU throughput (keep the f32
# preferred_element_type accumulation). Left at f32 here so the tight 1e-4
# correctness check below stays valid on every generation (v5e VPU/EUP have no
# bf16 anyway, so only the MXU inputs would change).
_MXU_IN_DTYPE = jnp.float32

_VMEM_LIMIT = 48 * 1024 * 1024  # safe on v5e/v6e (128 MiB) and v7x (64 MiB)


def _pick_row_tile(m, target=512):
    """Largest row tile <= target that divides m (prefer multiples of 8)."""
    if m <= target:
        return m
    for t in range(target, 7, -1):
        if m % t == 0 and t % 8 == 0:
            return t
    for t in range(target, 0, -1):
        if m % t == 0:
            return t
    return m


# --------------------------- qkv projection kernel ---------------------------

def _qkv_kernel(x_ref, w_ref, b_ref, o_ref):
    x = x_ref[...].astype(_MXU_IN_DTYPE)
    w = w_ref[0].astype(_MXU_IN_DTYPE)
    y = jnp.dot(x, w, preferred_element_type=jnp.float32)
    o_ref[0] = (y + b_ref[0].astype(jnp.float32)).astype(o_ref.dtype)


def qkv_projection(x2d, w_qkv, b_qkv, *, row_tile=512):
    """x2d: (M, C); w_qkv: (C, 3C) with out-channel layout (3, heads, head_dim);
    b_qkv: (3C,). Returns (3, M, C) so q/k/v are leading-axis slices and feed
    the downstream kernels with index_maps only (no HBM transposes)."""
    M, C = x2d.shape
    w3 = w_qkv.reshape(C, 3, C).transpose(1, 0, 2)   # (3, C, C)  -- tiny, one-time
    b3 = b_qkv.reshape(3, 1, C)
    tm = _pick_row_tile(M, row_tile)
    # rows outer, q/k/v inner: the x row-block index is unchanged across the
    # inner axis so its DMA is reused; outer row axis is megacore-parallel.
    grid = (M // tm, 3)
    return pl.pallas_call(
        _qkv_kernel,
        out_shape=jax.ShapeDtypeStruct((3, M, C), x2d.dtype),
        grid=grid,
        in_specs=[pl.BlockSpec((tm, C), lambda i, j: (i, 0)),
                  pl.BlockSpec((1, C, C), lambda i, j: (j, 0, 0)),
                  pl.BlockSpec((1, 1, C), lambda i, j: (j, 0, 0))],
        out_specs=pl.BlockSpec((1, tm, C), lambda i, j: (j, i, 0)),
        compiler_params=pltpu.CompilerParams(
            dimension_semantics=("parallel", "arbitrary"),
            vmem_limit_bytes=_VMEM_LIMIT),
    )(x2d, w3, b3)
    # TODO(synk): add a K-reduction grid axis + f32 VMEM accumulator if C grows
    # beyond a single-block contraction (C=288 in real MPViT still fits).


# --------------------------- depthwise 3x3 (LePE) ----------------------------

def _dwconv3x3_kernel(x_ref, w_ref, b_ref, o_ref):
    # x_ref: (1, H+2, W+2, C) zero-padded input; o_ref: (1, H, W, C)
    _, H, W, C = o_ref.shape
    acc = jnp.zeros((H, W, C), jnp.float32)
    for dh in range(3):
        for dw in range(3):
            acc = acc + (x_ref[0, dh:dh + H, dw:dw + W, :].astype(jnp.float32)
                         * w_ref[dh, dw, :].astype(jnp.float32))
    o_ref[0] = (acc + b_ref[0].astype(jnp.float32)).astype(o_ref.dtype)


def dwconv3x3(x_nhwc, w_hwc, b_c):
    """Depthwise 3x3, stride 1, pad 1. x: (B,H,W,C), w: (3,3,C), b: (C,)."""
    B, H, W, C = x_nhwc.shape
    xp = jnp.pad(x_nhwc, ((0, 0), (1, 1), (1, 1), (0, 0)))
    # TODO(synk): for production sizes (56x56x288) tile the grid over H rows and
    # express the horizontal taps via pltpu.roll / aligned pl.ds slices.
    return pl.pallas_call(
        _dwconv3x3_kernel,
        out_shape=jax.ShapeDtypeStruct((B, H, W, C), x_nhwc.dtype),
        grid=(B,),
        in_specs=[pl.BlockSpec((1, H + 2, W + 2, C), lambda b: (b, 0, 0, 0)),
                  pl.BlockSpec((3, 3, C), lambda b: (0, 0, 0)),
                  pl.BlockSpec((1, C), lambda b: (0, 0))],
        out_specs=pl.BlockSpec((1, H, W, C), lambda b: (b, 0, 0, 0)),
        compiler_params=pltpu.CompilerParams(dimension_semantics=("parallel",)),
    )(xp, w_hwc, b_c.reshape(1, C))


# ---------------------- fused SimA attention + projection --------------------

def _sima_proj_kernel(sm_ref, wp_ref, bp_ref, qkv_ref, lepe_ref,
                      xo_ref, attn_ref):
    q = qkv_ref[0, 0].astype(jnp.float32)     # (L, C) -- all heads fused
    k = qkv_ref[1, 0].astype(jnp.float32)
    v = qkv_ref[2, 0].astype(jnp.float32)
    lepe = lepe_ref[0].astype(jnp.float32)

    eps = 1e-12  # torch.nn.functional.normalize default
    qn = q / jnp.maximum(jnp.sqrt(jnp.sum(q * q, axis=0, keepdims=True)), eps)
    kn = k / jnp.maximum(jnp.sqrt(jnp.sum(k * k, axis=0, keepdims=True)), eps)

    # attn for all heads in one MXU call: (C, C) = kn^T @ v.  The block-diagonal
    # scale mask applies the per-head temperature and exactly zeroes cross-head
    # terms, so the fused second matmul below is head-block-diagonal.
    attn = lax.dot_general(kn.astype(_MXU_IN_DTYPE), v.astype(_MXU_IN_DTYPE),
                           (((0,), (0,)), ((), ())),
                           preferred_element_type=jnp.float32)
    attn = attn * sm_ref[...].astype(jnp.float32)

    out = jnp.dot(qn.astype(_MXU_IN_DTYPE), attn.astype(_MXU_IN_DTYPE),
                  preferred_element_type=jnp.float32) + lepe

    # fused output projection: lane-dense (L, C) store, no HBM round trip
    xo = jnp.dot(out.astype(_MXU_IN_DTYPE), wp_ref[...].astype(_MXU_IN_DTYPE),
                 preferred_element_type=jnp.float32) + bp_ref[...].astype(jnp.float32)

    xo_ref[0] = xo.astype(xo_ref.dtype)
    attn_ref[0] = attn.astype(attn_ref.dtype)


def sima_attention_proj(qkv3, lepe, scale_mask, w_proj, b_proj):
    """qkv3: (3, B, L, C); lepe: (B, L, C); scale_mask: (C, C);
    w_proj: (C, C); b_proj: (C,). Returns (x_out (B,L,C), attn_full (B,C,C))."""
    _, B, L, C = qkv3.shape
    return pl.pallas_call(
        _sima_proj_kernel,
        out_shape=(jax.ShapeDtypeStruct((B, L, C), qkv3.dtype),
                   jax.ShapeDtypeStruct((B, C, C), qkv3.dtype)),
        grid=(B,),
        in_specs=[pl.BlockSpec((C, C), lambda b: (0, 0)),
                  pl.BlockSpec((C, C), lambda b: (0, 0)),
                  pl.BlockSpec((1, C), lambda b: (0, 0)),
                  pl.BlockSpec((3, 1, L, C), lambda b: (0, b, 0, 0)),
                  pl.BlockSpec((1, L, C), lambda b: (b, 0, 0))],
        out_specs=(pl.BlockSpec((1, L, C), lambda b: (b, 0, 0)),
                   pl.BlockSpec((1, C, C), lambda b: (b, 0, 0))),
        compiler_params=pltpu.CompilerParams(
            dimension_semantics=("parallel",),   # batch axis -> 2 TCs on v7x
            vmem_limit_bytes=_VMEM_LIMIT),
    )(scale_mask, w_proj, b_proj.reshape(1, C), qkv3, lepe)
    # TODO(synk): tile the L axis (q/lepe/out blocks) for production L=3136 so
    # the per-step VMEM footprint fits v7x's 64 MiB.


# ------------------------------- forward glue ---------------------------------

def attention_forward(x, params, num_heads, H, W):
    """x: (B, L, C) with L = H*W. Returns (x_out (B,L,C), attn (B,N,D,D))."""
    B, L, C = x.shape
    D = C // num_heads

    # 1) qkv projection -> (3, B, L, C); channel layout (head, head_dim) matches
    #    the PyTorch reshape, so everything below is transpose-free.
    qkv3 = qkv_projection(x.reshape(B * L, C), params['w_qkv'], params['b_qkv'])
    qkv3 = qkv3.reshape(3, B, L, C)

    # 2) LePE: v viewed as an NHWC image with a free reshape (same channel
    #    ordering c = head*D + d as the PyTorch NCHW view).
    v_img = qkv3[2].reshape(B, H, W, C)
    lepe = dwconv3x3(v_img, params['w_dw'], params['b_dw']).reshape(B, L, C)

    # 3) fused SimA attention + output projection. Per-head temperature and the
    #    block-diagonal head structure live in a single (C, C) scale mask.
    head_id = jnp.repeat(jnp.arange(num_heads), D)
    scale_mask = ((head_id[:, None] == head_id[None, :]).astype(jnp.float32)
                  * jnp.repeat(params['temperature'], D)[None, :])
    x_out, attn_full = sima_attention_proj(qkv3, lepe, scale_mask,
                                           params['w_proj'], params['b_proj'])

    # 4) per-head (D, D) attention blocks (tiny; plain-JAX slice/stack).
    attn = jnp.stack([attn_full[:, h * D:(h + 1) * D, h * D:(h + 1) * D]
                      for h in range(num_heads)], axis=1)
    # proj_drop(p=0.0) -> identity
    return x_out, attn


def init_params(key, dim, num_heads):
    k1, k2, k3, k4, k5, k6 = jax.random.split(key, 6)
    s = 1.0 / math.sqrt(dim)
    return dict(
        temperature=jnp.ones((num_heads,), jnp.float32),
        w_qkv=jax.random.uniform(k1, (dim, 3 * dim), jnp.float32, -s, s),
        b_qkv=jax.random.uniform(k2, (3 * dim,), jnp.float32, -s, s),
        w_proj=jax.random.uniform(k3, (dim, dim), jnp.float32, -s, s),
        b_proj=jax.random.uniform(k4, (dim,), jnp.float32, -s, s),
        w_dw=jax.random.uniform(k5, (3, 3, dim), jnp.float32, -s, s),  # (kh,kw,C)
        b_dw=jax.random.uniform(k6, (dim,), jnp.float32, -s, s),
    )


# ----------------------------- pure-JAX reference -----------------------------

def reference_forward(x, p, num_heads, H, W):
    B, L, C = x.shape
    D = C // num_heads
    qkv = x @ p['w_qkv'] + p['b_qkv']
    qkv = qkv.reshape(B, L, 3, num_heads, D).transpose(2, 0, 3, 1, 4)
    q, k, v = qkv[0], qkv[1], qkv[2]
    qn = q / jnp.maximum(jnp.sqrt(jnp.sum(q * q, axis=-2, keepdims=True)), 1e-12)
    kn = k / jnp.maximum(jnp.sqrt(jnp.sum(k * k, axis=-2, keepdims=True)), 1e-12)
    v_nchw = v.transpose(0, 1, 3, 2).reshape(B, C, H, W)
    w_oihw = p['w_dw'].transpose(2, 0, 1)[:, None, :, :]    # (C,1,3,3)
    lepe_nchw = lax.conv_general_dilated(
        v_nchw, w_oihw, window_strides=(1, 1), padding='SAME',
        feature_group_count=C,
        dimension_numbers=('NCHW', 'OIHW', 'NCHW')) + p['b_dw'][None, :, None, None]
    lepe = lepe_nchw.reshape(B, num_heads, D, L).transpose(0, 1, 3, 2)
    attn = jnp.einsum('bnld,bnle->bnde', kn, v) * p['temperature'][None, :, None, None]
    out = jnp.einsum('bnld,bnde->bnle', qn, attn) + lepe
    xo = out.transpose(0, 2, 1, 3).reshape(B, L, C)
    xo = xo @ p['w_proj'] + p['b_proj']
    return xo, attn


# ----------------------------------- main --------------------------------------

if __name__ == "__main__":
    B, num_heads, H, W, dim = 2, 4, 8, 8, 32
    L = H * W
    D = dim // num_heads

    key = jax.random.PRNGKey(0)
    kx, kp = jax.random.split(key)
    x = jax.random.normal(kx, (B, L, dim), jnp.float32)
    params = init_params(kp, dim, num_heads)

    fwd = jax.jit(partial(attention_forward, num_heads=num_heads, H=H, W=W))
    x_out, attn = fwd(x, params)
    jax.block_until_ready((x_out, attn))

    # sanity check vs pure-JAX reference
    x_ref, attn_ref = reference_forward(x, params, num_heads, H, W)
    assert x_out.shape == (B, L, dim) and attn.shape == (B, num_heads, D, D)
    assert jnp.allclose(x_out, x_ref, rtol=1e-4, atol=1e-4)
    assert jnp.allclose(attn, attn_ref, rtol=1e-4, atol=1e-4)

    print("KERNEL_OK")
</pallas_src>

<mosaic_0001>
module attributes {stable_mosaic.version = 11 : i64} {
  func.func @_qkv_kernel(%arg0: i32, %arg1: i32, %arg2: memref<128x32xf32, #tpu.memory_space<vmem>>, %arg3: memref<1x32x32xf32, #tpu.memory_space<vmem>>, %arg4: memref<1x1x32xf32, #tpu.memory_space<vmem>>, %arg5: memref<1x128x32xf32, #tpu.memory_space<vmem>>) attributes {dimension_semantics = [#tpu.dimension_semantics<parallel>, #tpu.dimension_semantics<arbitrary>], iteration_bounds = array<i64: 1, 3>, scalar_prefetch = 0 : i64, scratch_operands = 0 : i64, tpu.core_type = #tpu.core_type<tc>, window_params = [{transform_indices = @transform_0, window_bounds = array<i64: 128, 32>}, {transform_indices = @transform_1, window_bounds = array<i64: 1, 32, 32>}, {transform_indices = @transform_2, window_bounds = array<i64: 1, 1, 32>}, {transform_indices = @transform_3, window_bounds = array<i64: 1, 128, 32>}]} {
    %c0 = arith.constant 0 : index
    %c0_0 = arith.constant 0 : index
    %0 = vector.load %arg2[%c0, %c0_0] : memref<128x32xf32, #tpu.memory_space<vmem>>, vector<128x32xf32>
    %c0_1 = arith.constant 0 : index
    %c0_2 = arith.constant 0 : index
    %c0_3 = arith.constant 0 : index
    %1 = vector.load %arg3[%c0_1, %c0_2, %c0_3] : memref<1x32x32xf32, #tpu.memory_space<vmem>>, vector<1x32x32xf32>
    %2 = vector.shape_cast %1 : vector<1x32x32xf32> to vector<32x32xf32>
    %cst = arith.constant dense<0.000000e+00> : vector<128x32xf32>
    %3 = tpu.matmul %0, %2, %cst {dimension_numbers = #tpu.dot_dimension_numbers<[1], [0], [0], [1], [0, 0, 1, 1], [], []>} : vector<128x32xf32>, vector<32x32xf32>, vector<128x32xf32> -> vector<128x32xf32>
    %c0_4 = arith.constant 0 : index
    %c0_5 = arith.constant 0 : index
    %c0_6 = arith.constant 0 : index
    %4 = vector.load %arg4[%c0_4, %c0_5, %c0_6] : memref<1x1x32xf32, #tpu.memory_space<vmem>>, vector<1x1x32xf32>
    %5 = vector.shape_cast %4 : vector<1x1x32xf32> to vector<1x32xf32>
    %6 = vector.broadcast %5 : vector<1x32xf32> to vector<128x32xf32>
    %7 = arith.addf %3, %6 : vector<128x32xf32>
    %c0_7 = arith.constant 0 : index
    %c0_8 = arith.constant 0 : index
    %c0_9 = arith.constant 0 : index
    %8 = vector.load %arg5[%c0_7, %c0_8, %c0_9] : memref<1x128x32xf32, #tpu.memory_space<vmem>>, vector<1x128x32xf32>
    %9 = vector.shape_cast %8 : vector<1x128x32xf32> to vector<128x32xf32>
    %10 = vector.shape_cast %7 : vector<128x32xf32> to vector<1x128x32xf32>
    tpu.vector_store %arg5[%c0_7, %c0_8, %c0_9], %10 {strides = array<i32>} : memref<1x128x32xf32, #tpu.memory_space<vmem>>, vector<1x128x32xf32>,
    return
  }
  func.func @transform_0(%arg0: i32, %arg1: i32) -> (i32, i32) {
    %c0_i32 = arith.constant 0 : i32
    %c0_i32_0 = arith.constant 0 : i32
    return %arg0, %c0_i32 : i32, i32
  }
  func.func @transform_1(%arg0: i32, %arg1: i32) -> (i32, i32, i32) {
    %c0_i32 = arith.constant 0 : i32
    %c0_i32_0 = arith.constant 0 : i32
    %c0_i32_1 = arith.constant 0 : i32
    return %arg1, %c0_i32, %c0_i32_0 : i32, i32, i32
  }
  func.func @transform_2(%arg0: i32, %arg1: i32) -> (i32, i32, i32) {
    %c0_i32 = arith.constant 0 : i32
    %c0_i32_0 = arith.constant 0 : i32
    %c0_i32_1 = arith.constant 0 : i32
    return %arg1, %c0_i32, %c0_i32_0 : i32, i32, i32
  }
  func.func @transform_3(%arg0: i32, %arg1: i32) -> (i32, i32, i32) {
    %c0_i32 = arith.constant 0 : i32
    %c0_i32_0 = arith.constant 0 : i32
    return %arg1, %arg0, %c0_i32 : i32, i32, i32
  }
}

module attributes {stable_mosaic.version = 11 : i64} {
  func.func @_dwconv3x3_kernel(%arg0: i32, %arg1: memref<1x10x10x32xf32, #tpu.memory_space<vmem>>, %arg2: memref<3x3x32xf32, #tpu.memory_space<vmem>>, %arg3: memref<1x32xf32, #tpu.memory_space<vmem>>, %arg4: memref<1x8x8x32xf32, #tpu.memory_space<vmem>>) attributes {dimension_semantics = [#tpu.dimension_semantics<parallel>], iteration_bounds = array<i64: 2>, scalar_prefetch = 0 : i64, scratch_operands = 0 : i64, tpu.core_type = #tpu.core_type<tc>, window_params = [{transform_indices = @transform_0, window_bounds = array<i64: 1, 10, 10, 32>}, {pipeline_mode = #tpu.pipeline_mode<synchronous>, transform_indices = @transform_1, window_bounds = array<i64: 3, 3, 32>}, {pipeline_mode = #tpu.pipeline_mode<synchronous>, transform_indices = @transform_2, window_bounds = array<i64: 1, 32>}, {transform_indices = @transform_3, window_bounds = array<i64: 1, 8, 8, 32>}]} {
    %cst = arith.constant 0.000000e+00 : f32
    %0 = vector.broadcast %cst : f32 to vector<8x8x32xf32>
    %c0 = arith.constant 0 : index
    %c0_0 = arith.constant 0 : index
    %c0_1 = arith.constant 0 : index
    %c0_2 = arith.constant 0 : index
    %1 = vector.load %arg1[%c0, %c0_0, %c0_1, %c0_2] : memref<1x10x10x32xf32, #tpu.memory_space<vmem>>, vector<1x8x8x32xf32>
    %2 = vector.shape_cast %1 : vector<1x8x8x32xf32> to vector<8x8x32xf32>
    %c0_3 = arith.constant 0 : index
    %c0_4 = arith.constant 0 : index
    %c0_5 = arith.constant 0 : index
    %3 = vector.load %arg2[%c0_3, %c0_4, %c0_5] : memref<3x3x32xf32, #tpu.memory_space<vmem>>, vector<1x1x32xf32>
    %4 = vector.shape_cast %3 : vector<1x1x32xf32> to vector<32xf32>
    %5 = vector.shape_cast %4 : vector<32xf32> to vector<1x1x32xf32>
    %6 = vector.broadcast %5 : vector<1x1x32xf32> to vector<8x8x32xf32>
    %7 = arith.mulf %2, %6 : vector<8x8x32xf32>
    %8 = arith.addf %0, %7 : vector<8x8x32xf32>
    %c0_6 = arith.constant 0 : index
    %c0_7 = arith.constant 0 : index
    %c1 = arith.constant 1 : index
    %c0_8 = arith.constant 0 : index
    %9 = vector.load %arg1[%c0_6, %c0_7, %c1, %c0_8] : memref<1x10x10x32xf32, #tpu.memory_space<vmem>>, vector<1x8x8x32xf32>
    %10 = vector.shape_cast %9 : vector<1x8x8x32xf32> to vector<8x8x32xf32>
    %c0_9 = arith.constant 0 : index
    %c1_10 = arith.constant 1 : index
    %c0_11 = arith.constant 0 : index
    %11 = vector.load %arg2[%c0_9, %c1_10, %c0_11] : memref<3x3x32xf32, #tpu.memory_space<vmem>>, vector<1x1x32xf32>
    %12 = vector.shape_cast %11 : vector<1x1x32xf32> to vector<32xf32>
    %13 = vector.shape_cast %12 : vector<32xf32> to vector<1x1x32xf32>
    %14 = vector.broadcast %13 : vector<1x1x32xf32> to vector<8x8x32xf32>
    %15 = arith.mulf %10, %14 : vector<8x8x32xf32>
    %16 = arith.addf %8, %15 : vector<8x8x32xf32>
    %c0_12 = arith.constant 0 : index
    %c0_13 = arith.constant 0 : index
    %c2 = arith.constant 2 : index
    %c0_14 = arith.constant 0 : index
    %17 = vector.load %arg1[%c0_12, %c0_13, %c2, %c0_14] : memref<1x10x10x32xf32, #tpu.memory_space<vmem>>, vector<1x8x8x32xf32>
    %18 = vector.shape_cast %17 : vector<1x8x8x32xf32> to vector<8x8x32xf32>
    %c0_15 = arith.constant 0 : index
    %c2_16 = arith.constant 2 : index
    %c0_17 = arith.constant 0 : index
    %19 = vector.load %arg2[%c0_15, %c2_16, %c0_17] : memref<3x3x32xf32, #tpu.memory_space<vmem>>, vector<1x1x32xf32>
    %20 = vector.shape_cast %19 : vector<1x1x32xf32> to vector<32xf32>
    %21 = vector.shape_cast %20 : vector<32xf32> to vector<1x1x32xf32>
    %22 = vector.broadcast %21 : vector<1x1x32xf32> to vector<8x8x32xf32>
    %23 = arith.mulf %18, %22 : vector<8x8x32xf32>
    %24 = arith.addf %16, %23 : vector<8x8x32xf32>
    %c0_18 = arith.constant 0 : index
    %c1_19 = arith.constant 1 : index
    %c0_20 = arith.constant 0 : index
    %c0_21 = arith.constant 0 : index
    %25 = vector.load %arg1[%c0_18, %c1_19, %c0_20, %c0_21] : memref<1x10x10x32xf32, #tpu.memory_space<vmem>>, vector<1x8x8x32xf32>
    %26 = vector.shape_cast %25 : vector<1x8x8x32xf32> to vector<8x8x32xf32>
    %c1_22 = arith.constant 1 : index
    %c0_23 = arith.constant 0 : index
    %c0_24 = arith.constant 0 : index
    %27 = vector.load %arg2[%c1_22, %c0_23, %c0_24] : memref<3x3x32xf32, #tpu.memory_space<vmem>>, vector<1x1x32xf32>
    %28 = vector.shape_cast %27 : vector<1x1x32xf32> to vector<32xf32>
    %29 = vector.shape_cast %28 : vector<32xf32> to vector<1x1x32xf32>
    %30 = vector.broadcast %29 : vector<1x1x32xf32> to vector<8x8x32xf32>
    %31 = arith.mulf %26, %30 : vector<8x8x32xf32>
    %32 = arith.addf %24, %31 : vector<8x8x32xf32>
    %c0_25 = arith.constant 0 : index
    %c1_26 = arith.constant 1 : index
    %c1_27 = arith.constant 1 : index
    %c0_28 = arith.constant 0 : index
    %33 = vector.load %arg1[%c0_25, %c1_26, %c1_27, %c0_28] : memref<1x10x10x32xf32, #tpu.memory_space<vmem>>, vector<1x8x8x32xf32>
    %34 = vector.shape_cast %33 : vector<1x8x8x32xf32> to vector<8x8x32xf32>
    %c1_29 = arith.constant 1 : index
    %c1_30 = arith.constant 1 : index
    %c0_31 = arith.constant 0 : index
    %35 = vector.load %arg2[%c1_29, %c1_30, %c0_31] : memref<3x3x32xf32, #tpu.memory_space<vmem>>, vector<1x1x32xf32>
    %36 = vector.shape_cast %35 : vector<1x1x32xf32> to vector<32xf32>
    %37 = vector.shape_cast %36 : vector<32xf32> to vector<1x1x32xf32>
    %38 = vector.broadcast %37 : vector<1x1x32xf32> to vector<8x8x32xf32>
    %39 = arith.mulf %34, %38 : vector<8x8x32xf32>
    %40 = arith.addf %32, %39 : vector<8x8x32xf32>
    %c0_32 = arith.constant 0 : index
    %c1_33 = arith.constant 1 : index
    %c2_34 = arith.constant 2 : index
    %c0_35 = arith.constant 0 : index
    %41 = vector.load %arg1[%c0_32, %c1_33, %c2_34, %c0_35] : memref<1x10x10x32xf32, #tpu.memory_space<vmem>>, vector<1x8x8x32xf32>
    %42 = vector.shape_cast %41 : vector<1x8x8x32xf32> to vector<8x8x32xf32>
    %c1_36 = arith.constant 1 : index
    %c2_37 = arith.constant 2 : index
    %c0_38 = arith.constant 0 : index
    %43 = vector.load %arg2[%c1_36, %c2_37, %c0_38] : memref<3x3x32xf32, #tpu.memory_space<vmem>>, vector<1x1x32xf32>
    %44 = vector.shape_cast %43 : vector<1x1x32xf32> to vector<32xf32>
    %45 = vector.shape_cast %44 : vector<32xf32> to vector<1x1x32xf32>
    %46 = vector.broadcast %45 : vector<1x1x32xf32> to vector<8x8x32xf32>
    %47 = arith.mulf %42, %46 : vector<8x8x32xf32>
    %48 = arith.addf %40, %47 : vector<8x8x32xf32>
    %c0_39 = arith.constant 0 : index
    %c2_40 = arith.constant 2 : index
    %c0_41 = arith.constant 0 : index
    %c0_42 = arith.constant 0 : index
    %49 = vector.load %arg1[%c0_39, %c2_40, %c0_41, %c0_42] : memref<1x10x10x32xf32, #tpu.memory_space<vmem>>, vector<1x8x8x32xf32>
    %50 = vector.shape_cast %49 : vector<1x8x8x32xf32> to vector<8x8x32xf32>
    %c2_43 = arith.constant 2 : index
    %c0_44 = arith.constant 0 : index
    %c0_45 = arith.constant 0 : index
    %51 = vector.load %arg2[%c2_43, %c0_44, %c0_45] : memref<3x3x32xf32, #tpu.memory_space<vmem>>, vector<1x1x32xf32>
    %52 = vector.shape_cast %51 : vector<1x1x32xf32> to vector<32xf32>
    %53 = vector.shape_cast %52 : vector<32xf32> to vector<1x1x32xf32>
    %54 = vector.broadcast %53 : vector<1x1x32xf32> to vector<8x8x32xf32>
    %55 = arith.mulf %50, %54 : vector<8x8x32xf32>
    %56 = arith.addf %48, %55 : vector<8x8x32xf32>
    %c0_46 = arith.constant 0 : index
    %c2_47 = arith.constant 2 : index
    %c1_48 = arith.constant 1 : index
    %c0_49 = arith.constant 0 : index
    %57 = vector.load %arg1[%c0_46, %c2_47, %c1_48, %c0_49] : memref<1x10x10x32xf32, #tpu.memory_space<vmem>>, vector<1x8x8x32xf32>
    %58 = vector.shape_cast %57 : vector<1x8x8x32xf32> to vector<8x8x32xf32>
    %c2_50 = arith.constant 2 : index
    %c1_51 = arith.constant 1 : index
    %c0_52 = arith.constant 0 : index
    %59 = vector.load %arg2[%c2_50, %c1_51, %c0_52] : memref<3x3x32xf32, #tpu.memory_space<vmem>>, vector<1x1x32xf32>
    %60 = vector.shape_cast %59 : vector<1x1x32xf32> to vector<32xf32>
    %61 = vector.shape_cast %60 : vector<32xf32> to vector<1x1x32xf32>
    %62 = vector.broadcast %61 : vector<1x1x32xf32> to vector<8x8x32xf32>
    %63 = arith.mulf %58, %62 : vector<8x8x32xf32>
    %64 = arith.addf %56, %63 : vector<8x8x32xf32>
    %c0_53 = arith.constant 0 : index
    %c2_54 = arith.constant 2 : index
    %c2_55 = arith.constant 2 : index
    %c0_56 = arith.constant 0 : index
    %65 = vector.load %arg1[%c0_53, %c2_54, %c2_55, %c0_56] : memref<1x10x10x32xf32, #tpu.memory_space<vmem>>, vector<1x8x8x32xf32>
    %66 = vector.shape_cast %65 : vector<1x8x8x32xf32> to vector<8x8x32xf32>
    %c2_57 = arith.constant 2 : index
    %c2_58 = arith.constant 2 : index
    %c0_59 = arith.constant 0 : index
    %67 = vector.load %arg2[%c2_57, %c2_58, %c0_59] : memref<3x3x32xf32, #tpu.memory_space<vmem>>, vector<1x1x32xf32>
    %68 = vector.shape_cast %67 : vector<1x1x32xf32> to vector<32xf32>
    %69 = vector.shape_cast %68 : vector<32xf32> to vector<1x1x32xf32>
    %70 = vector.broadcast %69 : vector<1x1x32xf32> to vector<8x8x32xf32>
    %71 = arith.mulf %66, %70 : vector<8x8x32xf32>
    %72 = arith.addf %64, %71 : vector<8x8x32xf32>
    %c0_60 = arith.constant 0 : index
    %c0_61 = arith.constant 0 : index
    %73 = vector.load %arg3[%c0_60, %c0_61] : memref<1x32xf32, #tpu.memory_space<vmem>>, vector<1x32xf32>
    %74 = vector.shape_cast %73 : vector<1x32xf32> to vector<32xf32>
    %75 = vector.shape_cast %74 : vector<32xf32> to vector<1x1x32xf32>
    %76 = vector.broadcast %75 : vector<1x1x32xf32> to vector<8x8x32xf32>
    %77 = arith.addf %72, %76 : vector<8x8x32xf32>
    %c0_62 = arith.constant 0 : index
    %c0_63 = arith.constant 0 : index
    %c0_64 = arith.constant 0 : index
    %c0_65 = arith.constant 0 : index
    %78 = vector.load %arg4[%c0_62, %c0_63, %c0_64, %c0_65] : memref<1x8x8x32xf32, #tpu.memory_space<vmem>>, vector<1x8x8x32xf32>
    %79 = vector.shape_cast %78 : vector<1x8x8x32xf32> to vector<8x8x32xf32>
    %80 = vector.shape_cast %77 : vector<8x8x32xf32> to vector<1x8x8x32xf32>
    tpu.vector_store %arg4[%c0_62, %c0_63, %c0_64, %c0_65], %80 {strides = array<i32>} : memref<1x8x8x32xf32, #tpu.memory_space<vmem>>, vector<1x8x8x32xf32>,
    return
  }
  func.func @transform_0(%arg0: i32) -> (i32, i32, i32, i32) {
    %c0_i32 = arith.constant 0 : i32
    %c0_i32_0 = arith.constant 0 : i32
    %c0_i32_1 = arith.constant 0 : i32
    %c0_i32_2 = arith.constant 0 : i32
    return %arg0, %c0_i32, %c0_i32_0, %c0_i32_1 : i32, i32, i32, i32
  }
  func.func @transform_1(%arg0: i32) -> (i32, i32, i32) {
    %c0_i32 = arith.constant 0 : i32
    %c0_i32_0 = arith.constant 0 : i32
    %c0_i32_1 = arith.constant 0 : i32
    %c0_i32_2 = arith.constant 0 : i32
    return %c0_i32, %c0_i32_0, %c0_i32_1 : i32, i32, i32
  }
  func.func @transform_2(%arg0: i32) -> (i32, i32) {
    %c0_i32 = arith.constant 0 : i32
    %c0_i32_0 = arith.constant 0 : i32
    %c0_i32_1 = arith.constant 0 : i32
    return %c0_i32, %c0_i32_0 : i32, i32
  }
  func.func @transform_3(%arg0: i32) -> (i32, i32, i32, i32) {
    %c0_i32 = arith.constant 0 : i32
    %c0_i32_0 = arith.constant 0 : i32
    %c0_i32_1 = arith.constant 0 : i32
    %c0_i32_2 = arith.constant 0 : i32
    return %arg0, %c0_i32, %c0_i32_0, %c0_i32_1 : i32, i32, i32, i32
  }
}

module attributes {stable_mosaic.version = 11 : i64} {
  func.func @_sima_proj_kernel(%arg0: i32, %arg1: memref<32x32xf32, #tpu.memory_space<vmem>>, %arg2: memref<32x32xf32, #tpu.memory_space<vmem>>, %arg3: memref<1x32xf32, #tpu.memory_space<vmem>>, %arg4: memref<3x1x64x32xf32, #tpu.memory_space<vmem>>, %arg5: memref<1x64x32xf32, #tpu.memory_space<vmem>>, %arg6: memref<1x64x32xf32, #tpu.memory_space<vmem>>, %arg7: memref<1x32x32xf32, #tpu.memory_space<vmem>>) attributes {dimension_semantics = [#tpu.dimension_semantics<parallel>], iteration_bounds = array<i64: 2>, scalar_prefetch = 0 : i64, scratch_operands = 0 : i64, tpu.core_type = #tpu.core_type<tc>, window_params = [{pipeline_mode = #tpu.pipeline_mode<synchronous>, transform_indices = @transform_0, window_bounds = array<i64: 32, 32>}, {pipeline_mode = #tpu.pipeline_mode<synchronous>, transform_indices = @transform_1, window_bounds = array<i64: 32, 32>}, {pipeline_mode = #tpu.pipeline_mode<synchronous>, transform_indices = @transform_2, window_bounds = array<i64: 1, 32>}, {transform_indices = @transform_3, window_bounds = array<i64: 3, 1, 64, 32>}, {transform_indices = @transform_4, window_bounds = array<i64: 1, 64, 32>}, {transform_indices = @transform_5, window_bounds = array<i64: 1, 64, 32>}, {transform_indices = @transform_6, window_bounds = array<i64: 1, 32, 32>}]} {
    %c0 = arith.constant 0 : index
    %c0_0 = arith.constant 0 : index
    %c0_1 = arith.constant 0 : index
    %c0_2 = arith.constant 0 : index
    %0 = vector.load %arg4[%c0, %c0_0, %c0_1, %c0_2] : memref<3x1x64x32xf32, #tpu.memory_space<vmem>>, vector<1x1x64x32xf32>
    %1 = vector.shape_cast %0 : vector<1x1x64x32xf32> to vector<64x32xf32>
    %c1 = arith.constant 1 : index
    %c0_3 = arith.constant 0 : index
    %c0_4 = arith.constant 0 : index
    %c0_5 = arith.constant 0 : index
    %2 = vector.load %arg4[%c1, %c0_3, %c0_4, %c0_5] : memref<3x1x64x32xf32, #tpu.memory_space<vmem>>, vector<1x1x64x32xf32>
    %3 = vector.shape_cast %2 : vector<1x1x64x32xf32> to vector<64x32xf32>
    %c2 = arith.constant 2 : index
    %c0_6 = arith.constant 0 : index
    %c0_7 = arith.constant 0 : index
    %c0_8 = arith.constant 0 : index
    %4 = vector.load %arg4[%c2, %c0_6, %c0_7, %c0_8] : memref<3x1x64x32xf32, #tpu.memory_space<vmem>>, vector<1x1x64x32xf32>
    %5 = vector.shape_cast %4 : vector<1x1x64x32xf32> to vector<64x32xf32>
    %c0_9 = arith.constant 0 : index
    %c0_10 = arith.constant 0 : index
    %c0_11 = arith.constant 0 : index
    %6 = vector.load %arg5[%c0_9, %c0_10, %c0_11] : memref<1x64x32xf32, #tpu.memory_space<vmem>>, vector<1x64x32xf32>
    %7 = vector.shape_cast %6 : vector<1x64x32xf32> to vector<64x32xf32>
    %8 = arith.mulf %1, %1 : vector<64x32xf32>
    %cst = arith.constant dense<0.000000e+00> : vector<32xf32>
    %9 = vector.multi_reduction <add>, %8, %cst [0] : vector<64x32xf32> to vector<32xf32>
    %10 = vector.shape_cast %9 : vector<32xf32> to vector<1x32xf32>
    %11 = math.sqrt %10 : vector<1x32xf32>
    %cst_12 = arith.constant 9.99999996E-13 : f32
    %12 = vector.broadcast %cst_12 : f32 to vector<1x32xf32>
    %13 = arith.maximumf %11, %12 : vector<1x32xf32>
    %14 = vector.broadcast %13 : vector<1x32xf32> to vector<64x32xf32>
    %15 = arith.divf %1, %14 : vector<64x32xf32>
    %16 = arith.mulf %3, %3 : vector<64x32xf32>
    %cst_13 = arith.constant dense<0.000000e+00> : vector<32xf32>
    %17 = vector.multi_reduction <add>, %16, %cst_13 [0] : vector<64x32xf32> to vector<32xf32>
    %18 = vector.shape_cast %17 : vector<32xf32> to vector<1x32xf32>
    %19 = math.sqrt %18 : vector<1x32xf32>
    %cst_14 = arith.constant 9.99999996E-13 : f32
    %20 = vector.broadcast %cst_14 : f32 to vector<1x32xf32>
    %21 = arith.maximumf %19, %20 : vector<1x32xf32>
    %22 = vector.broadcast %21 : vector<1x32xf32> to vector<64x32xf32>
    %23 = arith.divf %3, %22 : vector<64x32xf32>
    %cst_15 = arith.constant dense<0.000000e+00> : vector<32x32xf32>
    %24 = tpu.matmul %23, %5, %cst_15 {dimension_numbers = #tpu.dot_dimension_numbers<[0], [0], [1], [1], [0, 1, 1, 1], [], []>} : vector<64x32xf32>, vector<64x32xf32>, vector<32x32xf32> -> vector<32x32xf32>
    %c0_16 = arith.constant 0 : index
    %c0_17 = arith.constant 0 : index
    %25 = vector.load %arg1[%c0_16, %c0_17] : memref<32x32xf32, #tpu.memory_space<vmem>>, vector<32x32xf32>
    %26 = arith.mulf %24, %25 : vector<32x32xf32>
    %cst_18 = arith.constant dense<0.000000e+00> : vector<64x32xf32>
    %27 = tpu.matmul %15, %26, %cst_18 {dimension_numbers = #tpu.dot_dimension_numbers<[1], [0], [0], [1], [0, 0, 1, 1], [], []>} : vector<64x32xf32>, vector<32x32xf32>, vector<64x32xf32> -> vector<64x32xf32>
    %28 = arith.addf %27, %7 : vector<64x32xf32>
    %c0_19 = arith.constant 0 : index
    %c0_20 = arith.constant 0 : index
    %29 = vector.load %arg2[%c0_19, %c0_20] : memref<32x32xf32, #tpu.memory_space<vmem>>, vector<32x32xf32>
    %cst_21 = arith.constant dense<0.000000e+00> : vector<64x32xf32>
    %30 = tpu.matmul %28, %29, %cst_21 {dimension_numbers = #tpu.dot_dimension_numbers<[1], [0], [0], [1], [0, 0, 1, 1], [], []>} : vector<64x32xf32>, vector<32x32xf32>, vector<64x32xf32> -> vector<64x32xf32>
    %c0_22 = arith.constant 0 : index
    %c0_23 = arith.constant 0 : index
    %31 = vector.load %arg3[%c0_22, %c0_23] : memref<1x32xf32, #tpu.memory_space<vmem>>, vector<1x32xf32>
    %32 = vector.broadcast %31 : vector<1x32xf32> to vector<64x32xf32>
    %33 = arith.addf %30, %32 : vector<64x32xf32>
    %c0_24 = arith.constant 0 : index
    %c0_25 = arith.constant 0 : index
    %c0_26 = arith.constant 0 : index
    %34 = vector.load %arg6[%c0_24, %c0_25, %c0_26] : memref<1x64x32xf32, #tpu.memory_space<vmem>>, vector<1x64x32xf32>
    %35 = vector.shape_cast %34 : vector<1x64x32xf32> to vector<64x32xf32>
    %36 = vector.shape_cast %33 : vector<64x32xf32> to vector<1x64x32xf32>
    tpu.vector_store %arg6[%c0_24, %c0_25, %c0_26], %36 {strides = array<i32>} : memref<1x64x32xf32, #tpu.memory_space<vmem>>, vector<1x64x32xf32>,
    %c0_27 = arith.constant 0 : index
    %c0_28 = arith.constant 0 : index
    %c0_29 = arith.constant 0 : index
    %37 = vector.load %arg7[%c0_27, %c0_28, %c0_29] : memref<1x32x32xf32, #tpu.memory_space<vmem>>, vector<1x32x32xf32>
    %38 = vector.shape_cast %37 : vector<1x32x32xf32> to vector<32x32xf32>
    %39 = vector.shape_cast %26 : vector<32x32xf32> to vector<1x32x32xf32>
    tpu.vector_store %arg7[%c0_27, %c0_28, %c0_29], %39 {strides = array<i32>} : memref<1x32x32xf32, #tpu.memory_space<vmem>>, vector<1x32x32xf32>,
    return
  }
  func.func @transform_0(%arg0: i32) -> (i32, i32) {
    %c0_i32 = arith.constant 0 : i32
    %c0_i32_0 = arith.constant 0 : i32
    %c0_i32_1 = arith.constant 0 : i32
    return %c0_i32, %c0_i32_0 : i32, i32
  }
  func.func @transform_1(%arg0: i32) -> (i32, i32) {
    %c0_i32 = arith.constant 0 : i32
    %c0_i32_0 = arith.constant 0 : i32
    %c0_i32_1 = arith.constant 0 : i32
    return %c0_i32, %c0_i32_0 : i32, i32
  }
  func.func @transform_2(%arg0: i32) -> (i32, i32) {
    %c0_i32 = arith.constant 0 : i32
    %c0_i32_0 = arith.constant 0 : i32
    %c0_i32_1 = arith.constant 0 : i32
    return %c0_i32, %c0_i32_0 : i32, i32
  }
  func.func @transform_3(%arg0: i32) -> (i32, i32, i32, i32) {
    %c0_i32 = arith.constant 0 : i32
    %c0_i32_0 = arith.constant 0 : i32
    %c0_i32_1 = arith.constant 0 : i32
    %c0_i32_2 = arith.constant 0 : i32
    return %c0_i32, %arg0, %c0_i32_0, %c0_i32_1 : i32, i32, i32, i32
  }
  func.func @transform_4(%arg0: i32) -> (i32, i32, i32) {
    %c0_i32 = arith.constant 0 : i32
    %c0_i32_0 = arith.constant 0 : i32
    %c0_i32_1 = arith.constant 0 : i32
    return %arg0, %c0_i32, %c0_i32_0 : i32, i32, i32
  }
  func.func @transform_5(%arg0: i32) -> (i32, i32, i32) {
    %c0_i32 = arith.constant 0 : i32
    %c0_i32_0 = arith.constant 0 : i32
    %c0_i32_1 = arith.constant 0 : i32
    return %arg0, %c0_i32, %c0_i32_0 : i32, i32, i32
  }
  func.func @transform_6(%arg0: i32) -> (i32, i32, i32) {
    %c0_i32 = arith.constant 0 : i32
    %c0_i32_0 = arith.constant 0 : i32
    %c0_i32_1 = arith.constant 0 : i32
    return %arg0, %c0_i32, %c0_i32_0 : i32, i32, i32
  }
}

</mosaic_0001>

<llo_original>
// kernel: eq.8
$region0: #{eq.8}
  %s0 = inlined_call_operand.vmem [shape: s32[4,8], index: 0, kind: input, shape index: {}]
  %s1 = inlined_call_operand.vmem [shape: s32[32], index: 1, kind: output, shape index: {}]
  $region1: #{eq.8} parent=0
    #allocation0 [shape = 'u8[4096]{0}', space=vmem, size = 0x1000, scoped, tag = 'scoped mem for output reshape']
    #allocation1 [shape = 'u8[4096]{0}', space=vmem, size = 0x1000, scoped, tag = 'scoped mem for input reshape']
    %s3 = sshllo.u32 0, 4
    %v4 = vld [vmem:[%s0] sm:%s3]
    %5 = vst [vmem:[#allocation1] sm:%s3] %v4
    %v6 = vld [vmem:[#allocation1] sm:$0x1]
    %vm7 = vcmask 64512
    %8 = vst.msk [vmem:[#allocation0] sm:$0x1] %vm7, %v6
    %s9 = scalar_lea.vmem [#allocation1], 3
    %v10 = vld [vmem:[%s9] sm:$0x1]
    %11 = vrot.lane.b32.xlu0 %v10, 24
    %v12 = vpop.permute.xlu0 %11
    %vm13 = vcmask 261312
    %14 = vst.msk [vmem:[#allocation0] sm:$0x1] %vm13, %v12
    %s15 = scalar_lea.vmem [#allocation1], 2
    %v16 = vld [vmem:[%s15] sm:$0x1]
    %17 = vrot.lane.b32.xlu0 %v16, 16
    %v18 = vpop.permute.xlu0 %17
    %vm19 = vcmask 195712
    %20 = vst.msk [vmem:[#allocation0] sm:$0x1] %vm19, %v18
    %s21 = scalar_lea.vmem [#allocation1], 1
    %v22 = vld [vmem:[%s21] sm:$0x1]
    %23 = vrot.lane.b32.xlu0 %v22, 8
    %v24 = vpop.permute.xlu0 %23
    %vm25 = vcmask 130112
    %26 = vst.msk [vmem:[#allocation0] sm:$0x1] %vm25, %v24
    %s28 = sshllo.u32 0, 1
    %v30 = vld [vmem:[#allocation0] sm:%s28]
    %s31 = sshllo.u32 0, 1
    %32 = vst [vmem:[%s1] sm:%s31] %v30

// kernel: mul.5
$region0: #{mul.5}
  %s0 = inlined_call_operand.vmem [shape: f32[4,8], index: 0, kind: input, shape index: {}]
  %s1 = inlined_call_operand.vmem [shape: f32[32], index: 1, kind: output, shape index: {}]
  $region1: #{mul.5} parent=0
    #allocation0 [shape = 'u8[4096]{0}', space=vmem, size = 0x1000, scoped, tag = 'scoped mem for output reshape']
    #allocation1 [shape = 'u8[4096]{0}', space=vmem, size = 0x1000, scoped, tag = 'scoped mem for input reshape']
    %s3 = sshllo.u32 0, 4
    %v4 = vld [vmem:[%s0] sm:%s3]
    %5 = vst [vmem:[#allocation1] sm:%s3] %v4
    %v6 = vld [vmem:[#allocation1] sm:$0x1]
    %vm7 = vcmask 64512
    %8 = vst.msk [vmem:[#allocation0] sm:$0x1] %vm7, %v6
    %s9 = scalar_lea.vmem [#allocation1], 3
    %v10 = vld [vmem:[%s9] sm:$0x1]
    %11 = vrot.lane.b32.xlu0 %v10, 24
    %v12 = vpop.permute.xlu0 %11
    %vm13 = vcmask 261312
    %14 = vst.msk [vmem:[#allocation0] sm:$0x1] %vm13, %v12
    %s15 = scalar_lea.vmem [#allocation1], 2
    %v16 = vld [vmem:[%s15] sm:$0x1]
    %17 = vrot.lane.b32.xlu0 %v16, 16
    %v18 = vpop.permute.xlu0 %17
    %vm19 = vcmask 195712
    %20 = vst.msk [vmem:[#allocation0] sm:$0x1] %vm19, %v18
    %s21 = scalar_lea.vmem [#allocation1], 1
    %v22 = vld [vmem:[%s21] sm:$0x1]
    %23 = vrot.lane.b32.xlu0 %v22, 8
    %v24 = vpop.permute.xlu0 %23
    %vm25 = vcmask 130112
    %26 = vst.msk [vmem:[#allocation0] sm:$0x1] %vm25, %v24
    %s28 = sshllo.u32 0, 1
    %v30 = vld [vmem:[#allocation0] sm:%s28]
    %s31 = sshllo.u32 0, 1
    %32 = vst [vmem:[%s1] sm:%s31] %v30

// kernel: attention_forward.3
$region0: #{attention_forward.3}
  #allocation0 [shape = 'u32[]', space=smem, size = 0x4, offset = 0x4, fixed_abs, tag = 'smem constant byte address 0x4 - core index']
  #allocation1 [shape = 'u32[144,128]{1,0:T(1,128)}', space=vmem, size = 0x12000, scoped, tag = 'internal scratch']
  %s0 = inlined_call_operand.vmem [shape: f32[128,32], index: 0, kind: input, shape index: {}]
  %s1 = inlined_call_operand.vmem [shape: f32[3,32,32], index: 1, kind: input, shape index: {}]
  %s2 = inlined_call_operand.vmem [shape: f32[3,1,32], index: 2, kind: input, shape index: {}]
  %s3 = inlined_call_operand.vmem [shape: f32[3,128,32], index: 3, kind: output, shape index: {}]
  %s4 = sld [smem:[#allocation0]]
  $region45: #{attention_forward.3} parent=0
    _
  %s6 = ssub.s32 1, %s4
  %s7 = scalar_select 0, %s6, %s4
  loop: start=0, step=1, limit=5
  $region2: #{attention_forward.3} parent=0 // loop_pre_header
    _
  $region3: #{attention_forward.3} parent=0 // loop_header
    %s9 = sphi 0, %s13
    %p10 = scmp.ge.s32.totalorder %s9, 5
    %s16 = sphi 0, %s28
    %s17 = sphi 0, %s24
    %s18 = sphi 0, %s16
    %s19 = sphi 0, %s17
    %s20 = sphi 0, %s18
    %s21 = sphi 0, %s19
    %s31 = sphi 0, %s33
    %s34 = sphi 0, %s31
    %s35 = sphi 0, %s34
    %s51 = sphi 0, %s35
    %s57 = sphi 0, %s59
    %s60 = sphi 0, %s57
    %s61 = sphi 0, %s60
    %s77 = sphi 0, %s61
    %s83 = sphi 0, %s85
    %s86 = sphi 0, %s83
    %s87 = sphi 0, %s86
    %s103 = sphi 0, %s87
    %s111 = sphi 0, %s113
    %s114 = sphi 0, %s111
    %s115 = sphi 0, %s114
    %s131 = sphi 0, %s115
  $region4: #{attention_forward.3} parent=0 // loop_header_branch
    %12 = sbr.rel (%p10) target = $region8
  $region5: #{attention_forward.3} parent=0 // loop_body
    %s14 = ssub.s32 %s9, 1
    %s15 = ssub.s32 %s9, 2
    %s22 = sadd.s32 1, %s17
    %p23 = scmp.ge.s32.totalorder %s22, 3
    %s24 = scalar_select %p23, 0, %s22
    %s25 = sadd.s32 1, %s16
    %s26 = scalar_select %p23, %s25, %s16
    %p27 = scmp.ge.s32.totalorder %s26, 1
    %s28 = scalar_select %p27, 0, %s26
    %s29 = ssub.s32 %s16, %s28
    %p30 = scmp.eq.s32.totalorder %s29, 0
    %s32 = sadd.s32 %s31, 1
    %s33 = scalar_select %p30, %s31, %s32
    %p36 = pneg %p30
    %p37 = scmp.eq.s32.totalorder %s9, 2
    %p38 = por %p36, %p37
    %p39 = scmp.ne.s32.totalorder %s31, %s34
    %p40 = scmp.eq.s32.totalorder %s9, 0
    %p41 = por %p39, %p40
    %p42 = scmp.ne.s32.totalorder %s31, %s34
    %p43 = scmp.eq.s32.totalorder %s14, 2
    %p44 = por %p42, %p43
    %p45 = scmp.ne.s32.totalorder %s34, %s35
    %p46 = scmp.eq.s32.totalorder %s14, 0
    %p47 = por %p45, %p46
    %p48 = scmp.ne.s32.totalorder %s34, %s35
    %p49 = scmp.eq.s32.totalorder %s15, 2
    %p50 = por %p48, %p49
    %p52 = scmp.ne.s32.totalorder %s35, %s51
    %p53 = scmp.eq.s32.totalorder %s15, 0
    %p54 = por %p52, %p53
    %s55 = ssub.s32 %s17, %s24
    %p56 = scmp.eq.s32.totalorder %s55, 0
    %s58 = sadd.s32 %s57, 1
    %s59 = scalar_select %p56, %s57, %s58
    %p62 = pneg %p56
    %p63 = scmp.eq.s32.totalorder %s9, 2
    %p64 = por %p62, %p63
    %p65 = scmp.ne.s32.totalorder %s57, %s60
    %p66 = scmp.eq.s32.totalorder %s9, 0
    %p67 = por %p65, %p66
    %p68 = scmp.ne.s32.totalorder %s57, %s60
    %p69 = scmp.eq.s32.totalorder %s14, 2
    %p70 = por %p68, %p69
    %p71 = scmp.ne.s32.totalorder %s60, %s61
    %p72 = scmp.eq.s32.totalorder %s14, 0
    %p73 = por %p71, %p72
    %p74 = scmp.ne.s32.totalorder %s60, %s61
    %p75 = scmp.eq.s32.totalorder %s15, 2
    %p76 = por %p74, %p75
    %p78 = scmp.ne.s32.totalorder %s61, %s77
    %p79 = scmp.eq.s32.totalorder %s15, 0
    %p80 = por %p78, %p79
    %s81 = ssub.s32 %s17, %s24
    %p82 = scmp.eq.s32.totalorder %s81, 0
    %s84 = sadd.s32 %s83, 1
    %s85 = scalar_select %p82, %s83, %s84
    %p88 = pneg %p82
    %p89 = scmp.eq.s32.totalorder %s9, 2
    %p90 = por %p88, %p89
    %p91 = scmp.ne.s32.totalorder %s83, %s86
    %p92 = scmp.eq.s32.totalorder %s9, 0
    %p93 = por %p91, %p92
    %p94 = scmp.ne.s32.totalorder %s83, %s86
    %p95 = scmp.eq.s32.totalorder %s14, 2
    %p96 = por %p94, %p95
    %p97 = scmp.ne.s32.totalorder %s86, %s87
    %p98 = scmp.eq.s32.totalorder %s14, 0
    %p99 = por %p97, %p98
    %p100 = scmp.ne.s32.totalorder %s86, %s87
    %p101 = scmp.eq.s32.totalorder %s15, 2
    %p102 = por %p100, %p101
    %p104 = scmp.ne.s32.totalorder %s87, %s103
    %p105 = scmp.eq.s32.totalorder %s15, 0
    %p106 = por %p104, %p105
    %s107 = ssub.s32 %s17, %s24
    %s108 = ssub.s32 %s16, %s28
    %s109 = sor.u32 %s107, %s108
    %p110 = scmp.eq.s32.totalorder %s109, 0
    %s112 = sadd.s32 %s111, 1
    %s113 = scalar_select %p110, %s111, %s112
    %p116 = pneg %p110
    %p117 = scmp.eq.s32.totalorder %s9, 2
    %p118 = por %p116, %p117
    %p119 = scmp.ne.s32.totalorder %s111, %s114
    %p120 = scmp.eq.s32.totalorder %s9, 0
    %p121 = por %p119, %p120
    %p122 = scmp.ne.s32.totalorder %s111, %s114
    %p123 = scmp.eq.s32.totalorder %s14, 2
    %p124 = por %p122, %p123
    %p125 = scmp.ne.s32.totalorder %s114, %s115
    %p126 = scmp.eq.s32.totalorder %s14, 0
    %p127 = por %p125, %p126
    %p128 = scmp.ne.s32.totalorder %s114, %s115
    %p129 = scmp.eq.s32.totalorder %s15, 2
    %p130 = por %p128, %p129
    %p132 = scmp.ne.s32.totalorder %s115, %s131
    %p133 = scmp.eq.s32.totalorder %s15, 0
    %p134 = por %p132, %p133
    %p135 = scmp.le.s32.totalorder 1, %s9
    %p136 = scmp.lt.s32.totalorder %s9, 4
    %p137 = pnand %p135, %p136
    %p138 = pneg %p137
    // Predicated region
    $region9: #{attention_forward.3} parent=5 // pred_check
      _
    $region10: #{attention_forward.3} parent=5 // pred_check_branch
      %140 = sbr.rel (%p137) target = $region12
    $region11: #{attention_forward.3} parent=5 // pred_region
      %s141 = ssub.s32 %s9, 1
      // Predicated region
      $region13: #{attention_forward.3} parent=11 // pred_check
        %p142 = pneg %p47
      $region14: #{attention_forward.3} parent=11 // pred_check_branch
        %144 = sbr.rel (%p142) target = $region16
      $region15: #{attention_forward.3} parent=11 // pred_region
        %s145 = smul.u32 16, %s18
        %p146 = scmp.lt.s32.totalorder %s145, 15
        %s147 = scalar_select %p146, %s145, 15
        %s148 = smul.addr %s147, 8
        %s149 = scalar_lea.vmem %s0, %s148
        %s150 = smul.u32 16, %s18
      $region16: #{attention_forward.3} parent=11 // pred_fallthru
        _
    $region12: #{attention_forward.3} parent=5 // pred_fallthru
      _
    %p151 = scmp.lt.s32.totalorder %s9, 3
    // Predicated region
    $region17: #{attention_forward.3} parent=5 // pred_check
      %p152 = pneg %p151
    $region18: #{attention_forward.3} parent=5 // pred_check_branch
      %154 = sbr.rel (%p152) target = $region20
    $region19: #{attention_forward.3} parent=5 // pred_region
      // Predicated region
      $region21: #{attention_forward.3} parent=19 // pred_check
        %p155 = pneg %p67
      $region22: #{attention_forward.3} parent=19 // pred_check_branch
        %157 = sbr.rel (%p155) target = $region24
      $region23: #{attention_forward.3} parent=19 // pred_region
        %p158 = scmp.lt.s32.totalorder %s17, 2
        %s159 = scalar_select %p158, %s17, 2
        %s160 = smul.addr %s159, 4
        %s161 = smul.addr %s160, 8
        %s162 = scalar_lea.vmem %s1, %s161
      $region24: #{attention_forward.3} parent=19 // pred_fallthru
        _
      // Predicated region
      $region25: #{attention_forward.3} parent=19 // pred_check
        %p163 = pneg %p93
      $region26: #{attention_forward.3} parent=19 // pred_check_branch
        %165 = sbr.rel (%p163) target = $region28
      $region27: #{attention_forward.3} parent=19 // pred_region
        %p166 = scmp.lt.s32.totalorder %s17, 2
        %s167 = scalar_select %p166, %s17, 2
        %s168 = scalar_lea.vmem %s2, %s167
      $region28: #{attention_forward.3} parent=19 // pred_fallthru
        _
    $region20: #{attention_forward.3} parent=5 // pred_fallthru
      _
    %p169 = scmp.le.s32.totalorder 1, %s9
    %p170 = scmp.lt.s32.totalorder %s9, 4
    %p171 = pnand %p169, %p170
    %p172 = pneg %p171
    // Predicated region
    $region29: #{attention_forward.3} parent=5 // pred_check
      _
    $region30: #{attention_forward.3} parent=5 // pred_check_branch
      %174 = sbr.rel (%p171) target = $region32
    $region31: #{attention_forward.3} parent=5 // pred_region
      %s175 = ssub.s32 %s9, 1
      %s176 = smul.u32 16, %s18
      %p177 = scmp.lt.s32.totalorder %s176, 15
      %s178 = scalar_select %p177, %s176, 15
      %s179 = smul.addr %s178, 8
      %s180 = scalar_lea.vmem %s0, %s179
      %p181 = pneg %p47
      %p182 = pneg %p44
      %p183 = scmp.lt.s32.totalorder %s19, 2
      %s184 = scalar_select %p183, %s19, 2
      %s185 = smul.addr %s184, 4
      %s186 = smul.addr %s185, 8
      %s187 = scalar_lea.vmem %s1, %s186
      %p188 = pneg %p73
      %p189 = pneg %p70
      %p190 = scmp.lt.s32.totalorder %s19, 2
      %s191 = scalar_select %p190, %s19, 2
      %s192 = scalar_lea.vmem %s2, %s191
      %p193 = pneg %p99
      %p194 = pneg %p96
      %p195 = pneg %p127
      %p196 = pneg %p124
      %s197 = smul.u32 16, %s18
      %p198 = scmp.lt.s32.totalorder %s19, 2
      %s199 = scalar_select %p198, %s19, 2
      %p200 = scmp.lt.s32.totalorder %s197, 15
      %s201 = scalar_select %p200, %s197, 15
      %s202 = smul.addr %s199, 16
      %s203 = sadd.s32 %s201, %s202
      %s204 = smul.addr %s203, 8
      %s205 = scalar_lea.vmem %s3, %s204
      %s206 = smul.u32 16, %s18
      %p207 = scmp.lt.s32.totalorder %s206, 15
      %s208 = scalar_select %p207, %s206, 15
      %s209 = smul.addr %s208, 8
      %s210 = scalar_lea.vmem %s0, %s209
      %s211 = smul.u32 16, %s18
      %p212 = scmp.lt.s32.totalorder %s19, 2
      %s213 = scalar_select %p212, %s19, 2
      %s214 = smul.addr %s213, 4
      %s215 = smul.addr %s214, 8
      %s216 = scalar_lea.vmem %s1, %s215
      %p217 = scmp.lt.s32.totalorder %s19, 2
      %s218 = scalar_select %p217, %s19, 2
      %s219 = scalar_lea.vmem %s2, %s218
      %s220 = smul.u32 16, %s18
      %p221 = scmp.lt.s32.totalorder %s19, 2
      %s222 = scalar_select %p221, %s19, 2
      %p223 = scmp.lt.s32.totalorder %s220, 15
      %s224 = scalar_select %p223, %s220, 15
      %s225 = smul.addr %s222, 16
      %s226 = sadd.s32 %s224, %s225
      %s227 = smul.addr %s226, 8
      %s228 = scalar_lea.vmem %s3, %s227
      %s229 = smul.u32 16, %s18
      %v230 = vld [vmem:[%s210] sm:$0xff]
      %v231 = vld [vmem:[%s210 + $0x8] sm:$0xff]
      %v232 = vld [vmem:[%s210 + $0x10] sm:$0xff]
      %v233 = vld [vmem:[%s210 + $0x18] sm:$0xff]
      %v234 = vld [vmem:[%s210 + $0x20] sm:$0xff]
      %v235 = vld [vmem:[%s210 + $0x28] sm:$0xff]
      %v236 = vld [vmem:[%s210 + $0x30] sm:$0xff]
      %v237 = vld [vmem:[%s210 + $0x38] sm:$0xff]
      %v238 = vld [vmem:[%s210 + $0x40] sm:$0xff]
      %v239 = vld [vmem:[%s210 + $0x48] sm:$0xff]
      %v240 = vld [vmem:[%s210 + $0x50] sm:$0xff]
      %v241 = vld [vmem:[%s210 + $0x58] sm:$0xff]
      %v242 = vld [vmem:[%s210 + $0x60] sm:$0xff]
      %v243 = vld [vmem:[%s210 + $0x68] sm:$0xff]
      %v244 = vld [vmem:[%s210 + $0x70] sm:$0xff]
      %v245 = vld [vmem:[%s210 + $0x78] sm:$0xff]
      %v246 = vld [vmem:[%s216] sm:$0xff]
      %v247 = vld [vmem:[%s216 + $0x8] sm:$0xff]
      %v248 = vld [vmem:[%s216 + $0x10] sm:$0xff]
      %v249 = vld [vmem:[%s216 + $0x18] sm:$0xff]
      %v250 = vld [vmem:[%s219] sm:$0x1]
      %v252 = vlaneseq
      %v253 = vshrl.u32 %v252, 7
      %v254 = vsub.s32 0, %v253
      %v255 = vrot.slane %v250, %v254
      %vm257 = vcmask 261120
      %v259 = vsel %vm257, %v230, 0
      %v262 = vsel %vm257, %v231, 0
      %v265 = vsel %vm257, %v232, 0
      %v268 = vsel %vm257, %v233, 0
      %v271 = vsel %vm257, %v234, 0
      %v274 = vsel %vm257, %v235, 0
      %v277 = vsel %vm257, %v236, 0
      %v280 = vsel %vm257, %v237, 0
      %v283 = vsel %vm257, %v238, 0
      %v286 = vsel %vm257, %v239, 0
      %v289 = vsel %vm257, %v240, 0
      %v292 = vsel %vm257, %v241, 0
      %v295 = vsel %vm257, %v242, 0
      %v298 = vsel %vm257, %v243, 0
      %v301 = vsel %vm257, %v244, 0
      %v304 = vsel %vm257, %v245, 0
      %306 = vmatprep.subr.mxu0 0.0
      %307 = vmatpush1.msra.mxu0 %v246
      %308 = vmatprep.subr.mxu0 0.0
      %309 = vmatpush1.msra.mxu0 %v247
      %310 = vmatprep.subr.mxu0 0.0
      %311 = vmatpush1.msra.mxu0 %v248
      %312 = vmatprep.subr.mxu0 0.0
      %313 = vmatpush1.msra.mxu0 %v249
      %314 = vmatprep.subr.mxu0 0.0
      %315 = vmatpush1.msra.mxu0 0.0
      %316 = vmatprep.subr.mxu0 0.0
      %317 = vmatpush1.msra.mxu0 0.0
      %318 = vmatprep.subr.mxu0 0.0
      %319 = vmatpush1.msra.mxu0 0.0
      %320 = vmatprep.subr.mxu0 0.0
      %321 = vmatpush1.msra.mxu0 0.0
      %322 = vmatprep.subr.mxu0 0.0
      %323 = vmatpush1.msra.mxu0 0.0
      %324 = vmatprep.subr.mxu0 0.0
      %325 = vmatpush1.msra.mxu0 0.0
      %326 = vmatprep.subr.mxu0 0.0
      %327 = vmatpush1.msra.mxu0 0.0
      %328 = vmatprep.subr.mxu0 0.0
      %329 = vmatpush1.msra.mxu0 0.0
      %330 = vmatprep.subr.mxu0 0.0
      %331 = vmatpush1.msra.mxu0 0.0
      %332 = vmatprep.subr.mxu0 0.0
      %333 = vmatpush1.msra.mxu0 0.0
      %334 = vmatprep.subr.mxu0 0.0
      %335 = vmatpush1.msra.mxu0 0.0
      %336 = vmatprep.subr.mxu0 0.0
      %337 = vmatpush1.msra.mxu0 0.0
      %338 = vmatprep.subr.mxu0 0.0
      %339 = vmatpush1.msra.mxu0 0.0
      %340 = vmatprep.subr.mxu0 0.0
      %341 = vmatpush1.msra.mxu0 0.0
      %342 = vmatprep.subr.mxu0 0.0
      %343 = vmatpush1.msra.mxu0 0.0
      %344 = vmatprep.subr.mxu0 0.0
      %345 = vmatpush1.msra.mxu0 0.0
      %346 = vmatprep.subr.mxu0 0.0
      %347 = vmatpush1.msra.mxu0 0.0
      %348 = vmatprep.subr.mxu0 0.0
      %349 = vmatpush1.msra.mxu0 0.0
      %350 = vmatprep.subr.mxu0 0.0
      %351 = vmatpush1.msra.mxu0 0.0
      %352 = vmatprep.subr.mxu0 0.0
      %353 = vmatpush1.msra.mxu0 0.0
      %354 = vmatprep.subr.mxu0 0.0
      %355 = vmatpush1.msra.mxu0 0.0
      %356 = vmatprep.subr.mxu0 0.0
      %357 = vmatpush1.msra.mxu0 0.0
      %358 = vmatprep.subr.mxu0 0.0
      %359 = vmatpush1.msra.mxu0 0.0
      %360 = vmatprep.subr.mxu0 0.0
      %361 = vmatpush1.msra.mxu0 0.0
      %362 = vmatprep.subr.mxu0 0.0
      %363 = vmatpush1.msra.mxu0 0.0
      %364 = vmatprep.subr.mxu0 0.0
      %365 = vmatpush1.msra.mxu0 0.0
      %366 = vmatprep.subr.mxu0 0.0
      %367 = vmatpush1.msra.mxu0 0.0
      %368 = vmatprep.subr.mxu0 0.0
      %369 = vmatpush1.msra.mxu0 0.0
      %370 = vmatprep.mubr.f32.mxu0 0.0
      %371 = vmatmul.mubr.f32.gmra.mrb[0].mxu0 %v259
      %v372 = vpop.f32.mrb[0].mxu0
      %v373 = vadd.f32 %v255, %v372
      %v374 = vpop.f32.mrb[0].mxu0
      %375 = vmatprep.mubr.f32.mxu0 0.0
      %376 = vmatmul.mubr.f32.gmra.mrb[0].mxu0 %v262
      %v377 = vpop.f32.mrb[0].mxu0
      %v378 = vadd.f32 %v255, %v377
      %v379 = vpop.f32.mrb[0].mxu0
      %380 = vmatprep.mubr.f32.mxu0 0.0
      %381 = vmatmul.mubr.f32.gmra.mrb[0].mxu0 %v265
      %v382 = vpop.f32.mrb[0].mxu0
      %v383 = vadd.f32 %v255, %v382
      %v384 = vpop.f32.mrb[0].mxu0
      %385 = vmatprep.mubr.f32.mxu0 0.0
      %386 = vmatmul.mubr.f32.gmra.mrb[0].mxu0 %v268
      %v387 = vpop.f32.mrb[0].mxu0
      %v388 = vadd.f32 %v255, %v387
      %v389 = vpop.f32.mrb[0].mxu0
      %390 = vmatprep.mubr.f32.mxu0 0.0
      %391 = vmatmul.mubr.f32.gmra.mrb[0].mxu0 %v271
      %v392 = vpop.f32.mrb[0].mxu0
      %v393 = vadd.f32 %v255, %v392
      %v394 = vpop.f32.mrb[0].mxu0
      %395 = vmatprep.mubr.f32.mxu0 0.0
      %396 = vmatmul.mubr.f32.gmra.mrb[0].mxu0 %v274
      %v397 = vpop.f32.mrb[0].mxu0
      %v398 = vadd.f32 %v255, %v397
      %v399 = vpop.f32.mrb[0].mxu0
      %400 = vmatprep.mubr.f32.mxu0 0.0
      %401 = vmatmul.mubr.f32.gmra.mrb[0].mxu0 %v277
      %v402 = vpop.f32.mrb[0].mxu0
      %v403 = vadd.f32 %v255, %v402
      %v404 = vpop.f32.mrb[0].mxu0
      %405 = vmatprep.mubr.f32.mxu0 0.0
      %406 = vmatmul.mubr.f32.gmra.mrb[0].mxu0 %v280
      %v407 = vpop.f32.mrb[0].mxu0
      %v408 = vadd.f32 %v255, %v407
      %v409 = vpop.f32.mrb[0].mxu0
      %410 = vmatprep.mubr.f32.mxu0 0.0
      %411 = vmatmul.mubr.f32.gmra.mrb[0].mxu0 %v283
      %v412 = vpop.f32.mrb[0].mxu0
      %v413 = vadd.f32 %v255, %v412
      %v414 = vpop.f32.mrb[0].mxu0
      %415 = vmatprep.mubr.f32.mxu0 0.0
      %416 = vmatmul.mubr.f32.gmra.mrb[0].mxu0 %v286
      %v417 = vpop.f32.mrb[0].mxu0
      %v418 = vadd.f32 %v255, %v417
      %v419 = vpop.f32.mrb[0].mxu0
      %420 = vmatprep.mubr.f32.mxu0 0.0
      %421 = vmatmul.mubr.f32.gmra.mrb[0].mxu0 %v289
      %v422 = vpop.f32.mrb[0].mxu0
      %v423 = vadd.f32 %v255, %v422
      %v424 = vpop.f32.mrb[0].mxu0
      %425 = vmatprep.mubr.f32.mxu0 0.0
      %426 = vmatmul.mubr.f32.gmra.mrb[0].mxu0 %v292
      %v427 = vpop.f32.mrb[0].mxu0
      %v428 = vadd.f32 %v255, %v427
      %v429 = vpop.f32.mrb[0].mxu0
      %430 = vmatprep.mubr.f32.mxu0 0.0
      %431 = vmatmul.mubr.f32.gmra.mrb[0].mxu0 %v295
      %v432 = vpop.f32.mrb[0].mxu0
      %v433 = vadd.f32 %v255, %v432
      %v434 = vpop.f32.mrb[0].mxu0
      %435 = vmatprep.mubr.f32.mxu0 0.0
      %436 = vmatmul.mubr.f32.gmra.mrb[0].mxu0 %v298
      %v437 = vpop.f32.mrb[0].mxu0
      %v438 = vadd.f32 %v255, %v437
      %v439 = vpop.f32.mrb[0].mxu0
      %440 = vmatprep.mubr.f32.mxu0 0.0
      %441 = vmatmul.mubr.f32.gmra.mrb[0].mxu0 %v301
      %v442 = vpop.f32.mrb[0].mxu0
      %v443 = vadd.f32 %v255, %v442
      %v444 = vpop.f32.mrb[0].mxu0
      %445 = vmatprep.mubr.f32.mxu0 0.0
      %446 = vmatmul.mubr.f32.gmra.mrb[0].mxu0 %v304
      %v447 = vpop.f32.mrb[0].mxu0
      %v448 = vadd.f32 %v255, %v447
      %v449 = vpop.f32.mrb[0].mxu0
      %450 = vdwg.mxu0
      %451 = vst.msk [vmem:[%s228] sm:$0xff] %vm257, %v373
      %452 = vst.msk [vmem:[%s228 + $0x8] sm:$0xff] %vm257, %v378
      %453 = vst.msk [vmem:[%s228 + $0x10] sm:$0xff] %vm257, %v383
      %454 = vst.msk [vmem:[%s228 + $0x18] sm:$0xff] %vm257, %v388
      %455 = vst.msk [vmem:[%s228 + $0x20] sm:$0xff] %vm257, %v393
      %456 = vst.msk [vmem:[%s228 + $0x28] sm:$0xff] %vm257, %v398
      %457 = vst.msk [vmem:[%s228 + $0x30] sm:$0xff] %vm257, %v403
      %458 = vst.msk [vmem:[%s228 + $0x38] sm:$0xff] %vm257, %v408
      %459 = vst.msk [vmem:[%s228 + $0x40] sm:$0xff] %vm257, %v413
      %460 = vst.msk [vmem:[%s228 + $0x48] sm:$0xff] %vm257, %v418
      %461 = vst.msk [vmem:[%s228 + $0x50] sm:$0xff] %vm257, %v423
      %462 = vst.msk [vmem:[%s228 + $0x58] sm:$0xff] %vm257, %v428
      %463 = vst.msk [vmem:[%s228 + $0x60] sm:$0xff] %vm257, %v433
      %464 = vst.msk [vmem:[%s228 + $0x68] sm:$0xff] %vm257, %v438
      %465 = vst.msk [vmem:[%s228 + $0x70] sm:$0xff] %vm257, %v443
      %466 = vst.msk [vmem:[%s228 + $0x78] sm:$0xff] %vm257, %v448
      %s467 = smul.u32 16, %s18
      %p468 = scmp.lt.s32.totalorder %s19, 2
      %s469 = scalar_select %p468, %s19, 2
      %p470 = scmp.lt.s32.totalorder %s467, 15
      %s471 = scalar_select %p470, %s467, 15
      %s472 = smul.addr %s469, 16
      %s473 = sadd.s32 %s471, %s472
      %s474 = smul.addr %s473, 8
      %s475 = scalar_lea.vmem %s3, %s474
      // Predicated region
      $region33: #{attention_forward.3} parent=31 // pred_check
        %p476 = pneg %p124
      $region34: #{attention_forward.3} parent=31 // pred_check_branch
        %478 = sbr.rel (%p476) target = $region36
      $region35: #{attention_forward.3} parent=31 // pred_region
        %s479 = smul.u32 16, %s18
      $region36: #{attention_forward.3} parent=31 // pred_fallthru
        _
    $region32: #{attention_forward.3} parent=5 // pred_fallthru
      _
    %p480 = scmp.le.s32.totalorder 2, %s9
    // Predicated region
    $region37: #{attention_forward.3} parent=5 // pred_check
      %p481 = pneg %p480
    $region38: #{attention_forward.3} parent=5 // pred_check_branch
      %483 = sbr.rel (%p481) target = $region40
    $region39: #{attention_forward.3} parent=5 // pred_region
      %s484 = ssub.s32 %s9, 2
      // Predicated region
      $region41: #{attention_forward.3} parent=39 // pred_check
        %p485 = pneg %p130
      $region42: #{attention_forward.3} parent=39 // pred_check_branch
        %487 = sbr.rel (%p485) target = $region44
      $region43: #{attention_forward.3} parent=39 // pred_region
        %s488 = smul.u32 16, %s20
        %p489 = scmp.lt.s32.totalorder %s21, 2
        %s490 = scalar_select %p489, %s21, 2
        %p491 = scmp.lt.s32.totalorder %s488, 15
        %s492 = scalar_select %p491, %s488, 15
        %s493 = smul.addr %s490, 16
        %s494 = sadd.s32 %s492, %s493
        %s495 = smul.addr %s494, 8
        %s496 = scalar_lea.vmem %s3, %s495
      $region44: #{attention_forward.3} parent=39 // pred_fallthru
        _
    $region40: #{attention_forward.3} parent=5 // pred_fallthru
      _
  $region6: #{attention_forward.3} parent=0 // loop_footer
    %s13 = sadd.s32 1, %s9
  $region7: #{attention_forward.3} parent=0 // loop_footer_branch
    %8 = sbr.rel target = $region3
  $region8: #{attention_forward.3} parent=0 // loop_exit
    _

// kernel: attention_forward.5
$region0: #{attention_forward.5}
  #allocation0 [shape = 'u32[]', space=smem, size = 0x4, offset = 0x4, fixed_abs, tag = 'smem constant byte address 0x4 - core index']
  #allocation1 [shape = 'u32[144,128]{1,0:T(1,128)}', space=vmem, size = 0x12000, scoped, tag = 'internal scratch']
  %s0 = inlined_call_operand.vmem [shape: f32[32,32], index: 0, kind: input, shape index: {}]
  %s1 = inlined_call_operand.vmem [shape: f32[32,32], index: 1, kind: input, shape index: {}]
  %s2 = inlined_call_operand.vmem [shape: f32[1,32], index: 2, kind: input, shape index: {}]
  %s3 = inlined_call_operand.vmem [shape: f32[3,2,64,32], index: 3, kind: input, shape index: {}]
  %s4 = inlined_call_operand.vmem [shape: f32[2,64,32], index: 4, kind: input, shape index: {}]
  %s5 = inlined_call_operand.vmem [shape: f32[2,64,32], index: 5, kind: output, shape index: {0}]
  %s6 = inlined_call_operand.vmem [shape: f32[2,32,32], index: 6, kind: output, shape index: {1}]
  %7 = xla_tuple %s5, %s6
  %s8 = sld [smem:[#allocation0]]
  $region99: #{attention_forward.5} parent=0
    _
  %s10 = ssub.s32 1, %s8
  %s11 = scalar_select 0, %s10, %s8
  $region1: #{attention_forward.5} parent=0
    #allocation2 [shape = 'u8[196608]{0}', space=vmem, size = 0x30000, scoped, tag = 'input window, operand 3']
    loop: start=0, step=1, limit=4
    $region2: #{attention_forward.5} parent=1 // loop_pre_header
      _
    $region3: #{attention_forward.5} parent=1 // loop_header
      %s13 = sphi 0, %s17
      %p14 = scmp.ge.s32.totalorder %s13, 4
      %s21 = sphi 0, %s21
      %s23 = sphi 0, %s21
      %s24 = sphi 0, %s23
      %s38 = sphi 0, %s24
      %s42 = sphi 0, %s42
      %s44 = sphi 0, %s42
      %s45 = sphi 0, %s44
      %s59 = sphi 0, %s45
      %s63 = sphi 0, %s63
      %s65 = sphi 0, %s63
      %s66 = sphi 0, %s65
      %s80 = sphi 0, %s66
      %s86 = sphi 0, %s88
      %s89 = sphi 0, %s86
      %s90 = sphi 0, %s89
      %s106 = sphi 0, %s90
      %s112 = sphi 0, %s114
      %s115 = sphi 0, %s112
      %s116 = sphi 0, %s115
      %s132 = sphi 0, %s116
      %s138 = sphi 0, %s140
      %s141 = sphi 0, %s138
      %s142 = sphi 0, %s141
      %s158 = sphi 0, %s142
      %s164 = sphi 0, %s166
      %s167 = sphi 0, %s164
      %s168 = sphi 0, %s167
      %s184 = sphi 0, %s168
    $region4: #{attention_forward.5} parent=1 // loop_header_branch
      %16 = sbr.rel (%p14) target = $region8
    $region5: #{attention_forward.5} parent=1 // loop_body
      %s18 = ssub.s32 %s13, 1
      %s19 = ssub.s32 %s13, 2
      %s20 = sadd.s32 %s13, 1
      %s22 = sadd.s32 %s21, 1
      %p25 = scmp.eq.s32.totalorder %s13, 1
      %p26 = scmp.ne.s32.totalorder %s21, %s23
      %p27 = scmp.eq.s32.totalorder %s13, 0
      %p28 = por %p26, %p27
      %p29 = scmp.ne.s32.totalorder %s21, %s23
      %p30 = scmp.eq.s32.totalorder %s18, 1
      %p31 = por %p29, %p30
      %p32 = scmp.ne.s32.totalorder %s23, %s24
      %p33 = scmp.eq.s32.totalorder %s18, 0
      %p34 = por %p32, %p33
      %p35 = scmp.ne.s32.totalorder %s23, %s24
      %p36 = scmp.eq.s32.totalorder %s19, 1
      %p37 = por %p35, %p36
      %p39 = scmp.ne.s32.totalorder %s24, %s38
      %p40 = scmp.eq.s32.totalorder %s19, 0
      %p41 = por %p39, %p40
      %s43 = sadd.s32 %s42, 1
      %p46 = scmp.eq.s32.totalorder %s13, 1
      %p47 = scmp.ne.s32.totalorder %s42, %s44
      %p48 = scmp.eq.s32.totalorder %s13, 0
      %p49 = por %p47, %p48
      %p50 = scmp.ne.s32.totalorder %s42, %s44
      %p51 = scmp.eq.s32.totalorder %s18, 1
      %p52 = por %p50, %p51
      %p53 = scmp.ne.s32.totalorder %s44, %s45
      %p54 = scmp.eq.s32.totalorder %s18, 0
      %p55 = por %p53, %p54
      %p56 = scmp.ne.s32.totalorder %s44, %s45
      %p57 = scmp.eq.s32.totalorder %s19, 1
      %p58 = por %p56, %p57
      %p60 = scmp.ne.s32.totalorder %s45, %s59
      %p61 = scmp.eq.s32.totalorder %s19, 0
      %p62 = por %p60, %p61
      %s64 = sadd.s32 %s63, 1
      %p67 = scmp.eq.s32.totalorder %s13, 1
      %p68 = scmp.ne.s32.totalorder %s63, %s65
      %p69 = scmp.eq.s32.totalorder %s13, 0
      %p70 = por %p68, %p69
      %p71 = scmp.ne.s32.totalorder %s63, %s65
      %p72 = scmp.eq.s32.totalorder %s18, 1
      %p73 = por %p71, %p72
      %p74 = scmp.ne.s32.totalorder %s65, %s66
      %p75 = scmp.eq.s32.totalorder %s18, 0
      %p76 = por %p74, %p75
      %p77 = scmp.ne.s32.totalorder %s65, %s66
      %p78 = scmp.eq.s32.totalorder %s19, 1
      %p79 = por %p77, %p78
      %p81 = scmp.ne.s32.totalorder %s66, %s80
      %p82 = scmp.eq.s32.totalorder %s19, 0
      %p83 = por %p81, %p82
      %s84 = ssub.s32 %s13, %s20
      %p85 = scmp.eq.s32.totalorder %s84, 0
      %s87 = sadd.s32 %s86, 1
      %s88 = scalar_select %p85, %s86, %s87
      %p91 = pneg %p85
      %p92 = scmp.eq.s32.totalorder %s13, 1
      %p93 = por %p91, %p92
      %p94 = scmp.ne.s32.totalorder %s86, %s89
      %p95 = scmp.eq.s32.totalorder %s13, 0
      %p96 = por %p94, %p95
      %p97 = scmp.ne.s32.totalorder %s86, %s89
      %p98 = scmp.eq.s32.totalorder %s18, 1
      %p99 = por %p97, %p98
      %p100 = scmp.ne.s32.totalorder %s89, %s90
      %p101 = scmp.eq.s32.totalorder %s18, 0
      %p102 = por %p100, %p101
      %p103 = scmp.ne.s32.totalorder %s89, %s90
      %p104 = scmp.eq.s32.totalorder %s19, 1
      %p105 = por %p103, %p104
      %p107 = scmp.ne.s32.totalorder %s90, %s106
      %p108 = scmp.eq.s32.totalorder %s19, 0
      %p109 = por %p107, %p108
      %s110 = ssub.s32 %s13, %s20
      %p111 = scmp.eq.s32.totalorder %s110, 0
      %s113 = sadd.s32 %s112, 1
      %s114 = scalar_select %p111, %s112, %s113
      %p117 = pneg %p111
      %p118 = scmp.eq.s32.totalorder %s13, 1
      %p119 = por %p117, %p118
      %p120 = scmp.ne.s32.totalorder %s112, %s115
      %p121 = scmp.eq.s32.totalorder %s13, 0
      %p122 = por %p120, %p121
      %p123 = scmp.ne.s32.totalorder %s112, %s115
      %p124 = scmp.eq.s32.totalorder %s18, 1
      %p125 = por %p123, %p124
      %p126 = scmp.ne.s32.totalorder %s115, %s116
      %p127 = scmp.eq.s32.totalorder %s18, 0
      %p128 = por %p126, %p127
      %p129 = scmp.ne.s32.totalorder %s115, %s116
      %p130 = scmp.eq.s32.totalorder %s19, 1
      %p131 = por %p129, %p130
      %p133 = scmp.ne.s32.totalorder %s116, %s132
      %p134 = scmp.eq.s32.totalorder %s19, 0
      %p135 = por %p133, %p134
      %s136 = ssub.s32 %s13, %s20
      %p137 = scmp.eq.s32.totalorder %s136, 0
      %s139 = sadd.s32 %s138, 1
      %s140 = scalar_select %p137, %s138, %s139
      %p143 = pneg %p137
      %p144 = scmp.eq.s32.totalorder %s13, 1
      %p145 = por %p143, %p144
      %p146 = scmp.ne.s32.totalorder %s138, %s141
      %p147 = scmp.eq.s32.totalorder %s13, 0
      %p148 = por %p146, %p147
      %p149 = scmp.ne.s32.totalorder %s138, %s141
      %p150 = scmp.eq.s32.totalorder %s18, 1
      %p151 = por %p149, %p150
      %p152 = scmp.ne.s32.totalorder %s141, %s142
      %p153 = scmp.eq.s32.totalorder %s18, 0
      %p154 = por %p152, %p153
      %p155 = scmp.ne.s32.totalorder %s141, %s142
      %p156 = scmp.eq.s32.totalorder %s19, 1
      %p157 = por %p155, %p156
      %p159 = scmp.ne.s32.totalorder %s142, %s158
      %p160 = scmp.eq.s32.totalorder %s19, 0
      %p161 = por %p159, %p160
      %s162 = ssub.s32 %s13, %s20
      %p163 = scmp.eq.s32.totalorder %s162, 0
      %s165 = sadd.s32 %s164, 1
      %s166 = scalar_select %p163, %s164, %s165
      %p169 = pneg %p163
      %p170 = scmp.eq.s32.totalorder %s13, 1
      %p171 = por %p169, %p170
      %p172 = scmp.ne.s32.totalorder %s164, %s167
      %p173 = scmp.eq.s32.totalorder %s13, 0
      %p174 = por %p172, %p173
      %p175 = scmp.ne.s32.totalorder %s164, %s167
      %p176 = scmp.eq.s32.totalorder %s18, 1
      %p177 = por %p175, %p176
      %p178 = scmp.ne.s32.totalorder %s167, %s168
      %p179 = scmp.eq.s32.totalorder %s18, 0
      %p180 = por %p178, %p179
      %p181 = scmp.ne.s32.totalorder %s167, %s168
      %p182 = scmp.eq.s32.totalorder %s19, 1
      %p183 = por %p181, %p182
      %p185 = scmp.ne.s32.totalorder %s168, %s184
      %p186 = scmp.eq.s32.totalorder %s19, 0
      %p187 = por %p185, %p186
      %p188 = scmp.le.s32.totalorder 1, %s13
      %p189 = scmp.lt.s32.totalorder %s13, 3
      %p190 = pnand %p188, %p189
      %p191 = pneg %p190
      // Predicated region
      $region9: #{attention_forward.5} parent=5 // pred_check
        _
      $region10: #{attention_forward.5} parent=5 // pred_check_branch
        %193 = sbr.rel (%p190) target = $region12
      $region11: #{attention_forward.5} parent=5 // pred_region
        %s194 = ssub.s32 %s13, 1
        // Predicated region
        $region13: #{attention_forward.5} parent=11 // pred_check
          %p195 = pneg %p34
        $region14: #{attention_forward.5} parent=11 // pred_check_branch
          %197 = sbr.rel (%p195) target = $region16
        $region15: #{attention_forward.5} parent=11 // pred_region
          _
        $region16: #{attention_forward.5} parent=11 // pred_fallthru
          _
        // Predicated region
        $region17: #{attention_forward.5} parent=11 // pred_check
          %p198 = pneg %p55
        $region18: #{attention_forward.5} parent=11 // pred_check_branch
          %200 = sbr.rel (%p198) target = $region20
        $region19: #{attention_forward.5} parent=11 // pred_region
          _
        $region20: #{attention_forward.5} parent=11 // pred_fallthru
          _
        // Predicated region
        $region21: #{attention_forward.5} parent=11 // pred_check
          %p201 = pneg %p76
        $region22: #{attention_forward.5} parent=11 // pred_check_branch
          %203 = sbr.rel (%p201) target = $region24
        $region23: #{attention_forward.5} parent=11 // pred_region
          _
        $region24: #{attention_forward.5} parent=11 // pred_fallthru
          _
      $region12: #{attention_forward.5} parent=5 // pred_fallthru
        _
      %p204 = scmp.lt.s32.totalorder %s13, 2
      // Predicated region
      $region25: #{attention_forward.5} parent=5 // pred_check
        %p205 = pneg %p204
      $region26: #{attention_forward.5} parent=5 // pred_check_branch
        %207 = sbr.rel (%p205) target = $region28
      $region27: #{attention_forward.5} parent=5 // pred_region
        // Predicated region
        $region29: #{attention_forward.5} parent=27 // pred_check
          %p208 = pneg %p96
        $region30: #{attention_forward.5} parent=27 // pred_check_branch
          %210 = sbr.rel (%p208) target = $region32
        $region31: #{attention_forward.5} parent=27 // pred_region
          %s211 = sand.u32 %s86, 1
          %s212 = sand.u32 %s86, 1
          %s213 = smul.addr %s212, 192
          %s214 = scalar_lea.vmem [#allocation2], %s213
          %s215 = smul.addr %s13, 8
          %s216 = smul.addr %s215, 8
          %s217 = scalar_lea.vmem %s3, %s216
          // Predicated region
          $region33: #{attention_forward.5} parent=31 // pred_check
            _
          $region34: #{attention_forward.5} parent=31 // pred_check_branch
            %219 = sbr.rel (0) target = $region36
          $region35: #{attention_forward.5} parent=31 // pred_region
            // Predicated region
            $region37: #{attention_forward.5} parent=35 // pred_check
              _
            $region38: #{attention_forward.5} parent=35 // pred_check_branch
              %221 = sbr.rel (0) target = $region40
            $region39: #{attention_forward.5} parent=35 // pred_region
              // Predicated region
              $region52: #{attention_forward.5} parent=39 // pred_check
                _
              $region53: #{attention_forward.5} parent=39 // pred_check_branch
                %282 = sbr.rel (0) target = $region55
              $region54: #{attention_forward.5} parent=39 // pred_region
                loop: start=0, step=1, limit=1
                $region56: #{attention_forward.5} parent=54 // loop_pre_header
                  _
                $region57: #{attention_forward.5} parent=54 // loop_header
                  %s284 = sphi 0, %s288
                  %p285 = scmp.ge.s32.totalorder %s284, 1
                  %s289 = sphi %s217, %s217
                  %s290 = sphi %s214, %s214
                $region58: #{attention_forward.5} parent=54 // loop_header_branch
                  %287 = sbr.rel (%p285) target = $region62
                $region59: #{attention_forward.5} parent=54 // loop_body
                  %v291 = vld [vmem:[%s289] sm:$0xff]
                  %292 = vst [vmem:[%s290] sm:$0xff] %v291
                  %v293 = vld [vmem:[%s289 + $0x8] sm:$0xff]
                  %294 = vst [vmem:[%s290 + $0x8] sm:$0xff] %v293
                  %v295 = vld [vmem:[%s289 + $0x10] sm:$0xff]
                  %296 = vst [vmem:[%s290 + $0x10] sm:$0xff] %v295
                  %v297 = vld [vmem:[%s289 + $0x18] sm:$0xff]
                  %298 = vst [vmem:[%s290 + $0x18] sm:$0xff] %v297
                  %v299 = vld [vmem:[%s289 + $0x20] sm:$0xff]
                  %300 = vst [vmem:[%s290 + $0x20] sm:$0xff] %v299
                  %v301 = vld [vmem:[%s289 + $0x28] sm:$0xff]
                  %302 = vst [vmem:[%s290 + $0x28] sm:$0xff] %v301
                  %v303 = vld [vmem:[%s289 + $0x30] sm:$0xff]
                  %304 = vst [vmem:[%s290 + $0x30] sm:$0xff] %v303
                  %v305 = vld [vmem:[%s289 + $0x38] sm:$0xff]
                  %306 = vst [vmem:[%s290 + $0x38] sm:$0xff] %v305
                  %v307 = vld [vmem:[%s289 + $0x80] sm:$0xff]
                  %308 = vst [vmem:[%s290 + $0x40] sm:$0xff] %v307
                  %v309 = vld [vmem:[%s289 + $0x88] sm:$0xff]
                  %310 = vst [vmem:[%s290 + $0x48] sm:$0xff] %v309
                  %v311 = vld [vmem:[%s289 + $0x90] sm:$0xff]
                  %312 = vst [vmem:[%s290 + $0x50] sm:$0xff] %v311
                  %v313 = vld [vmem:[%s289 + $0x98] sm:$0xff]
                  %314 = vst [vmem:[%s290 + $0x58] sm:$0xff] %v313
                  %v315 = vld [vmem:[%s289 + $0xa0] sm:$0xff]
                  %316 = vst [vmem:[%s290 + $0x60] sm:$0xff] %v315
                  %v317 = vld [vmem:[%s289 + $0xa8] sm:$0xff]
                  %318 = vst [vmem:[%s290 + $0x68] sm:$0xff] %v317
                  %v319 = vld [vmem:[%s289 + $0xb0] sm:$0xff]
                  %320 = vst [vmem:[%s290 + $0x70] sm:$0xff] %v319
                  %v321 = vld [vmem:[%s289 + $0xb8] sm:$0xff]
                  %322 = vst [vmem:[%s290 + $0x78] sm:$0xff] %v321
                  %v323 = vld [vmem:[%s289 + $0x100] sm:$0xff]
                  %324 = vst [vmem:[%s290 + $0x80] sm:$0xff] %v323
                  %v325 = vld [vmem:[%s289 + $0x108] sm:$0xff]
                  %326 = vst [vmem:[%s290 + $0x88] sm:$0xff] %v325
                  %v327 = vld [vmem:[%s289 + $0x110] sm:$0xff]
                  %328 = vst [vmem:[%s290 + $0x90] sm:$0xff] %v327
                  %v329 = vld [vmem:[%s289 + $0x118] sm:$0xff]
                  %330 = vst [vmem:[%s290 + $0x98] sm:$0xff] %v329
                  %v331 = vld [vmem:[%s289 + $0x120] sm:$0xff]
                  %332 = vst [vmem:[%s290 + $0xa0] sm:$0xff] %v331
                  %v333 = vld [vmem:[%s289 + $0x128] sm:$0xff]
                  %334 = vst [vmem:[%s290 + $0xa8] sm:$0xff] %v333
                  %v335 = vld [vmem:[%s289 + $0x130] sm:$0xff]
                  %336 = vst [vmem:[%s290 + $0xb0] sm:$0xff] %v335
                  %v337 = vld [vmem:[%s289 + $0x138] sm:$0xff]
                  %338 = vst [vmem:[%s290 + $0xb8] sm:$0xff] %v337
                $region60: #{attention_forward.5} parent=54 // loop_footer
                  %s288 = sadd.s32 1, %s284
                $region61: #{attention_forward.5} parent=54 // loop_footer_branch
                  %283 = sbr.rel target = $region57
                $region62: #{attention_forward.5} parent=54 // loop_exit
                  _
              $region55: #{attention_forward.5} parent=39 // pred_fallthru
                _
              // Predicated region
              $region63: #{attention_forward.5} parent=39 // pred_check
                _
              $region64: #{attention_forward.5} parent=39 // pred_check_branch
                %340 = sbr.rel target = $region66
              $region65: #{attention_forward.5} parent=39 // pred_region
                _
              $region66: #{attention_forward.5} parent=39 // pred_fallthru
                _
            $region40: #{attention_forward.5} parent=35 // pred_fallthru
              _
            // Predicated region
            $region41: #{attention_forward.5} parent=35 // pred_check
              _
            $region42: #{attention_forward.5} parent=35 // pred_check_branch
              %223 = sbr.rel target = $region44
            $region43: #{attention_forward.5} parent=35 // pred_region
              loop: start=0, step=1, limit=1
              $region45: #{attention_forward.5} parent=43 // loop_pre_header
                _
              $region46: #{attention_forward.5} parent=43 // loop_header
                %s226 = sphi 0, %s230
                %p227 = scmp.ge.s32.totalorder %s226, 1
                %s231 = sphi %s217, %s217
                %s232 = sphi %s214, %s214
              $region47: #{attention_forward.5} parent=43 // loop_header_branch
                %229 = sbr.rel (%p227) target = $region51
              $region48: #{attention_forward.5} parent=43 // loop_body
                %v233 = vld [vmem:[%s231] sm:$0xff]
                %234 = vst [vmem:[%s232] sm:$0xff] %v233
                %v235 = vld [vmem:[%s231 + $0x8] sm:$0xff]
                %236 = vst [vmem:[%s232 + $0x8] sm:$0xff] %v235
                %v237 = vld [vmem:[%s231 + $0x10] sm:$0xff]
                %238 = vst [vmem:[%s232 + $0x10] sm:$0xff] %v237
                %v239 = vld [vmem:[%s231 + $0x18] sm:$0xff]
                %240 = vst [vmem:[%s232 + $0x18] sm:$0xff] %v239
                %v241 = vld [vmem:[%s231 + $0x20] sm:$0xff]
                %242 = vst [vmem:[%s232 + $0x20] sm:$0xff] %v241
                %v243 = vld [vmem:[%s231 + $0x28] sm:$0xff]
                %244 = vst [vmem:[%s232 + $0x28] sm:$0xff] %v243
                %v245 = vld [vmem:[%s231 + $0x30] sm:$0xff]
                %246 = vst [vmem:[%s232 + $0x30] sm:$0xff] %v245
                %v247 = vld [vmem:[%s231 + $0x38] sm:$0xff]
                %248 = vst [vmem:[%s232 + $0x38] sm:$0xff] %v247
                %v249 = vld [vmem:[%s231 + $0x80] sm:$0xff]
                %250 = vst [vmem:[%s232 + $0x40] sm:$0xff] %v249
                %v251 = vld [vmem:[%s231 + $0x88] sm:$0xff]
                %252 = vst [vmem:[%s232 + $0x48] sm:$0xff] %v251
                %v253 = vld [vmem:[%s231 + $0x90] sm:$0xff]
                %254 = vst [vmem:[%s232 + $0x50] sm:$0xff] %v253
                %v255 = vld [vmem:[%s231 + $0x98] sm:$0xff]
                %256 = vst [vmem:[%s232 + $0x58] sm:$0xff] %v255
                %v257 = vld [vmem:[%s231 + $0xa0] sm:$0xff]
                %258 = vst [vmem:[%s232 + $0x60] sm:$0xff] %v257
                %v259 = vld [vmem:[%s231 + $0xa8] sm:$0xff]
                %260 = vst [vmem:[%s232 + $0x68] sm:$0xff] %v259
                %v261 = vld [vmem:[%s231 + $0xb0] sm:$0xff]
                %262 = vst [vmem:[%s232 + $0x70] sm:$0xff] %v261
                %v263 = vld [vmem:[%s231 + $0xb8] sm:$0xff]
                %264 = vst [vmem:[%s232 + $0x78] sm:$0xff] %v263
                %v265 = vld [vmem:[%s231 + $0x100] sm:$0xff]
                %266 = vst [vmem:[%s232 + $0x80] sm:$0xff] %v265
                %v267 = vld [vmem:[%s231 + $0x108] sm:$0xff]
                %268 = vst [vmem:[%s232 + $0x88] sm:$0xff] %v267
                %v269 = vld [vmem:[%s231 + $0x110] sm:$0xff]
                %270 = vst [vmem:[%s232 + $0x90] sm:$0xff] %v269
                %v271 = vld [vmem:[%s231 + $0x118] sm:$0xff]
                %272 = vst [vmem:[%s232 + $0x98] sm:$0xff] %v271
                %v273 = vld [vmem:[%s231 + $0x120] sm:$0xff]
                %274 = vst [vmem:[%s232 + $0xa0] sm:$0xff] %v273
                %v275 = vld [vmem:[%s231 + $0x128] sm:$0xff]
                %276 = vst [vmem:[%s232 + $0xa8] sm:$0xff] %v275
                %v277 = vld [vmem:[%s231 + $0x130] sm:$0xff]
                %278 = vst [vmem:[%s232 + $0xb0] sm:$0xff] %v277
                %v279 = vld [vmem:[%s231 + $0x138] sm:$0xff]
                %280 = vst [vmem:[%s232 + $0xb8] sm:$0xff] %v279
              $region49: #{attention_forward.5} parent=43 // loop_footer
                %s230 = sadd.s32 1, %s226
              $region50: #{attention_forward.5} parent=43 // loop_footer_branch
                %225 = sbr.rel target = $region46
              $region51: #{attention_forward.5} parent=43 // loop_exit
                _
            $region44: #{attention_forward.5} parent=35 // pred_fallthru
              _
          $region36: #{attention_forward.5} parent=31 // pred_fallthru
            _
          %341 = vnop
        $region32: #{attention_forward.5} parent=27 // pred_fallthru
          _
        // Predicated region
        $region67: #{attention_forward.5} parent=27 // pred_check
          %p342 = pneg %p122
        $region68: #{attention_forward.5} parent=27 // pred_check_branch
          %344 = sbr.rel (%p342) target = $region70
        $region69: #{attention_forward.5} parent=27 // pred_region
          %p345 = scmp.lt.s32.totalorder %s13, 1
          %s346 = scalar_select %p345, %s13, 1
          %s347 = smul.addr %s346, 8
          %s348 = smul.addr %s347, 8
          %s349 = scalar_lea.vmem %s4, %s348
        $region70: #{attention_forward.5} parent=27 // pred_fallthru
          _
      $region28: #{attention_forward.5} parent=5 // pred_fallthru
        _
      %p350 = scmp.le.s32.totalorder 1, %s13
      %p351 = scmp.lt.s32.totalorder %s13, 3
      %p352 = pnand %p350, %p351
      %p353 = pneg %p352
      // Predicated region
      $region71: #{attention_forward.5} parent=5 // pred_check
        _
      $region72: #{attention_forward.5} parent=5 // pred_check_branch
        %355 = sbr.rel (%p352) target = $region74
      $region73: #{attention_forward.5} parent=5 // pred_region
        %s356 = ssub.s32 %s13, 1
        %s357 = sand.u32 %s89, 1
        %s358 = sand.u32 %s89, 1
        %s359 = smul.addr %s358, 192
        %s360 = scalar_lea.vmem [#allocation2], %s359
        // Predicated region
        $region75: #{attention_forward.5} parent=73 // pred_check
          %p361 = pneg %p102
        $region76: #{attention_forward.5} parent=73 // pred_check_branch
          %363 = sbr.rel (%p361) target = $region78
        $region77: #{attention_forward.5} parent=73 // pred_region
          _
        $region78: #{attention_forward.5} parent=73 // pred_fallthru
          _
        %p364 = pneg %p34
        %p365 = pneg %p31
        %p366 = pneg %p55
        %p367 = pneg %p52
        %p368 = pneg %p76
        %p369 = pneg %p73
        %s370 = sand.u32 %s89, 1
        %s371 = sand.u32 %s89, 1
        %s372 = smul.addr %s371, 192
        %s373 = scalar_lea.vmem [#allocation2], %s372
        %p374 = pneg %p102
        %p375 = pneg %p99
        %p376 = scmp.lt.s32.totalorder %s18, 1
        %s377 = scalar_select %p376, %s18, 1
        %s378 = smul.addr %s377, 8
        %s379 = smul.addr %s378, 8
        %s380 = scalar_lea.vmem %s4, %s379
        %p381 = pneg %p128
        %p382 = pneg %p125
        %p383 = pneg %p154
        %p384 = pneg %p151
        %p385 = scmp.lt.s32.totalorder %s18, 1
        %s386 = scalar_select %p385, %s18, 1
        %s387 = smul.addr %s386, 8
        %s388 = smul.addr %s387, 8
        %s389 = scalar_lea.vmem %s5, %s388
        %p390 = pneg %p180
        %p391 = pneg %p177
        %p392 = scmp.lt.s32.totalorder %s18, 1
        %s393 = scalar_select %p392, %s18, 1
        %s394 = smul.addr %s393, 4
        %s395 = smul.addr %s394, 8
        %s396 = scalar_lea.vmem %s6, %s395
        %p397 = scmp.lt.s32.totalorder %s18, 1
        %s398 = scalar_select %p397, %s18, 1
        %s399 = smul.addr %s398, 8
        %s400 = smul.addr %s399, 8
        %s401 = scalar_lea.vmem %s4, %s400
        %p402 = scmp.lt.s32.totalorder %s18, 1
        %s403 = scalar_select %p402, %s18, 1
        %s404 = smul.addr %s403, 8
        %s405 = smul.addr %s404, 8
        %s406 = scalar_lea.vmem %s5, %s405
        %p407 = scmp.lt.s32.totalorder %s18, 1
        %s408 = scalar_select %p407, %s18, 1
        %s409 = smul.addr %s408, 4
        %s410 = smul.addr %s409, 8
        %s411 = scalar_lea.vmem %s6, %s410
        %v412 = vld [vmem:[%s360] sm:$0xff]
        %v413 = vld [vmem:[%s360 + $0x8] sm:$0xff]
        %v414 = vld [vmem:[%s360 + $0x10] sm:$0xff]
        %v415 = vld [vmem:[%s360 + $0x18] sm:$0xff]
        %v416 = vld [vmem:[%s360 + $0x20] sm:$0xff]
        %v417 = vld [vmem:[%s360 + $0x28] sm:$0xff]
        %v418 = vld [vmem:[%s360 + $0x30] sm:$0xff]
        %v419 = vld [vmem:[%s360 + $0x38] sm:$0xff]
        %s420 = scalar_lea.vmem %s360, 64 [#allocation2]
        %v421 = vld [vmem:[%s420] sm:$0xff]
        %v422 = vld [vmem:[%s420 + $0x8] sm:$0xff]
        %v423 = vld [vmem:[%s420 + $0x10] sm:$0xff]
        %v424 = vld [vmem:[%s420 + $0x18] sm:$0xff]
        %v425 = vld [vmem:[%s420 + $0x20] sm:$0xff]
        %v426 = vld [vmem:[%s420 + $0x28] sm:$0xff]
        %v427 = vld [vmem:[%s420 + $0x30] sm:$0xff]
        %v428 = vld [vmem:[%s420 + $0x38] sm:$0xff]
        %s429 = scalar_lea.vmem %s360, 128 [#allocation2]
        %v430 = vld [vmem:[%s429] sm:$0xff]
        %v431 = vld [vmem:[%s429 + $0x8] sm:$0xff]
        %v432 = vld [vmem:[%s429 + $0x10] sm:$0xff]
        %v433 = vld [vmem:[%s429 + $0x18] sm:$0xff]
        %v434 = vld [vmem:[%s429 + $0x20] sm:$0xff]
        %v435 = vld [vmem:[%s429 + $0x28] sm:$0xff]
        %v436 = vld [vmem:[%s429 + $0x30] sm:$0xff]
        %v437 = vld [vmem:[%s429 + $0x38] sm:$0xff]
        %v438 = vld [vmem:[%s401] sm:$0xff]
        %v439 = vld [vmem:[%s401 + $0x8] sm:$0xff]
        %v440 = vld [vmem:[%s401 + $0x10] sm:$0xff]
        %v441 = vld [vmem:[%s401 + $0x18] sm:$0xff]
        %v442 = vld [vmem:[%s401 + $0x20] sm:$0xff]
        %v443 = vld [vmem:[%s401 + $0x28] sm:$0xff]
        %v444 = vld [vmem:[%s401 + $0x30] sm:$0xff]
        %v445 = vld [vmem:[%s401 + $0x38] sm:$0xff]
        %v446 = vmul.f32 %v412, %v412
        %v447 = vmul.f32 %v413, %v413
        %v448 = vmul.f32 %v414, %v414
        %v449 = vmul.f32 %v415, %v415
        %v450 = vmul.f32 %v416, %v416
        %v451 = vmul.f32 %v417, %v417
        %v452 = vmul.f32 %v418, %v418
        %v453 = vmul.f32 %v419, %v419
        %vm454 = vcmask 261120
        %v455 = vsel %vm454, %v446, 0.0
        %v456 = vsel %vm454, %v447, 0.0
        %v457 = vadd.f32 %v455, %v456
        %v458 = vsel %vm454, %v448, 0.0
        %v459 = vadd.f32 %v457, %v458
        %v460 = vsel %vm454, %v449, 0.0
        %v461 = vadd.f32 %v459, %v460
        %v462 = vsel %vm454, %v450, 0.0
        %v463 = vadd.f32 %v461, %v462
        %v464 = vsel %vm454, %v451, 0.0
        %v465 = vadd.f32 %v463, %v464
        %v466 = vsel %vm454, %v452, 0.0
        %v467 = vadd.f32 %v465, %v466
        %v468 = vsel %vm454, %v453, 0.0
        %v469 = vadd.f32 %v467, %v468
        %v470 = vrot.slane %v469, 4
        %v471 = vadd.f32 %v469, %v470
        %v472 = vrot.slane %v471, 2
        %v473 = vadd.f32 %v471, %v472
        %v474 = vrot.slane %v473, 1
        %v475 = vadd.f32 %v473, %v474
        %v476 = vrsqrt.pop %v475
        %v477 = vmul.f32 %v475, %v476
        %vm478 = vcmp.eq.f32.partialorder %v475, inf
        %v479 = vsel %vm478, %v475, %v477
        %vm480 = vcmp.eq.f32.partialorder %v475, 0.0
        %v481 = vand.u32 %v475, 2147483648
        %v482 = vsel %vm480, %v481, %v479
        %v483 = vmax.f32 %v482, 1e-12
        %v484 = vrcp.pop %v483
        %v485 = vmul.f32 %v412, %v484
        %v486 = vmul.f32 %v413, %v484
        %v487 = vmul.f32 %v414, %v484
        %v488 = vmul.f32 %v415, %v484
        %v489 = vmul.f32 %v416, %v484
        %v490 = vmul.f32 %v417, %v484
        %v491 = vmul.f32 %v418, %v484
        %v492 = vmul.f32 %v419, %v484
        %v493 = vmul.f32 %v421, %v421
        %v494 = vmul.f32 %v422, %v422
        %v495 = vmul.f32 %v423, %v423
        %v496 = vmul.f32 %v424, %v424
        %v497 = vmul.f32 %v425, %v425
        %v498 = vmul.f32 %v426, %v426
        %v499 = vmul.f32 %v427, %v427
        %v500 = vmul.f32 %v428, %v428
        %v501 = vsel %vm454, %v493, 0.0
        %v502 = vsel %vm454, %v494, 0.0
        %v503 = vadd.f32 %v501, %v502
        %v504 = vsel %vm454, %v495, 0.0
        %v505 = vadd.f32 %v503, %v504
        %v506 = vsel %vm454, %v496, 0.0
        %v507 = vadd.f32 %v505, %v506
        %v508 = vsel %vm454, %v497, 0.0
        %v509 = vadd.f32 %v507, %v508
        %v510 = vsel %vm454, %v498, 0.0
        %v511 = vadd.f32 %v509, %v510
        %v512 = vsel %vm454, %v499, 0.0
        %v513 = vadd.f32 %v511, %v512
        %v514 = vsel %vm454, %v500, 0.0
        %v515 = vadd.f32 %v513, %v514
        %v516 = vrot.slane %v515, 4
        %v517 = vadd.f32 %v515, %v516
        %v518 = vrot.slane %v517, 2
        %v519 = vadd.f32 %v517, %v518
        %v520 = vrot.slane %v519, 1
        %v521 = vadd.f32 %v519, %v520
        %v522 = vrsqrt.pop %v521
        %v523 = vmul.f32 %v521, %v522
        %vm524 = vcmp.eq.f32.partialorder %v521, inf
        %v525 = vsel %vm524, %v521, %v523
        %vm526 = vcmp.eq.f32.partialorder %v521, 0.0
        %v527 = vand.u32 %v521, 2147483648
        %v528 = vsel %vm526, %v527, %v525
        %v529 = vmax.f32 %v528, 1e-12
        %v530 = vrcp.pop %v529
        %v531 = vmul.f32 %v421, %v530
        %v532 = vmul.f32 %v422, %v530
        %v533 = vmul.f32 %v423, %v530
        %v534 = vmul.f32 %v424, %v530
        %v535 = vmul.f32 %v425, %v530
        %v536 = vmul.f32 %v426, %v530
        %v537 = vmul.f32 %v427, %v530
        %v538 = vmul.f32 %v428, %v530
        %539 = vxpose.xlu0.b32.start [1/16] %v531, 128
        %540 = vxpose.xlu0.b32.cont [2/16] %v532, 128
        %541 = vxpose.xlu0.b32.cont [3/16] %v533, 128
        %542 = vxpose.xlu0.b32.cont [4/16] %v534, 128
        %543 = vxpose.xlu0.b32.cont [5/16] %v535, 128
        %544 = vxpose.xlu0.b32.cont [6/16] %v536, 128
        %545 = vxpose.xlu0.b32.cont [7/16] %v537, 128
        %546 = vxpose.xlu0.b32.cont [8/16] %v538, 128
        %547 = vxpose.xlu0.b32.cont [9/16] 0.0, 128
        %548 = vxpose.xlu0.b32.cont [10/16] 0.0, 128
        %549 = vxpose.xlu0.b32.cont [11/16] 0.0, 128
        %550 = vxpose.xlu0.b32.cont [12/16] 0.0, 128
        %551 = vxpose.xlu0.b32.cont [13/16] 0.0, 128
        %552 = vxpose.xlu0.b32.cont [14/16] 0.0, 128
        %553 = vxpose.xlu0.b32.cont [15/16] 0.0, 128
        %554 = vxpose.xlu0.b32.end [16/16] 0.0, 128
        %v555 = vpop.trf.xlu0
        %v556 = vpop.trf.xlu0
        %v557 = vpop.trf.xlu0
        %v558 = vpop.trf.xlu0
        %v559 = vpop.trf.xlu0
        %v560 = vpop.trf.xlu0
        %v561 = vpop.trf.xlu0
        %v562 = vpop.trf.xlu0
        %v563 = vpop.trf.xlu0
        %v564 = vpop.trf.xlu0
        %v565 = vpop.trf.xlu0
        %v566 = vpop.trf.xlu0
        %v567 = vpop.trf.xlu0
        %v568 = vpop.trf.xlu0
        %v569 = vpop.trf.xlu0
        %v570 = vpop.trf.xlu0
        %vm571 = vcmask 523264
        %v573 = vsel %vm571, %v555, 0
        %v576 = vsel %vm571, %v556, 0
        %v579 = vsel %vm571, %v557, 0
        %v582 = vsel %vm571, %v558, 0
        %584 = vmatprep.subr.mxu0 0.0
        %585 = vmatpush1.msra.mxu0 %v430
        %586 = vmatprep.subr.mxu0 0.0
        %587 = vmatpush1.msra.mxu0 %v431
        %588 = vmatprep.subr.mxu0 0.0
        %589 = vmatpush1.msra.mxu0 %v432
        %590 = vmatprep.subr.mxu0 0.0
        %591 = vmatpush1.msra.mxu0 %v433
        %592 = vmatprep.subr.mxu0 0.0
        %593 = vmatpush1.msra.mxu0 %v434
        %594 = vmatprep.subr.mxu0 0.0
        %595 = vmatpush1.msra.mxu0 %v435
        %596 = vmatprep.subr.mxu0 0.0
        %597 = vmatpush1.msra.mxu0 %v436
        %598 = vmatprep.subr.mxu0 0.0
        %599 = vmatpush1.msra.mxu0 %v437
        %600 = vmatprep.subr.mxu0 0.0
        %601 = vmatpush1.msra.mxu0 0.0
        %602 = vmatprep.subr.mxu0 0.0
        %603 = vmatpush1.msra.mxu0 0.0
        %604 = vmatprep.subr.mxu0 0.0
        %605 = vmatpush1.msra.mxu0 0.0
        %606 = vmatprep.subr.mxu0 0.0
        %607 = vmatpush1.msra.mxu0 0.0
        %608 = vmatprep.subr.mxu0 0.0
        %609 = vmatpush1.msra.mxu0 0.0
        %610 = vmatprep.subr.mxu0 0.0
        %611 = vmatpush1.msra.mxu0 0.0
        %612 = vmatprep.subr.mxu0 0.0
        %613 = vmatpush1.msra.mxu0 0.0
        %614 = vmatprep.subr.mxu0 0.0
        %615 = vmatpush1.msra.mxu0 0.0
        %616 = vmatprep.subr.mxu0 0.0
        %617 = vmatpush1.msra.mxu0 0.0
        %618 = vmatprep.subr.mxu0 0.0
        %619 = vmatpush1.msra.mxu0 0.0
        %620 = vmatprep.subr.mxu0 0.0
        %621 = vmatpush1.msra.mxu0 0.0
        %622 = vmatprep.subr.mxu0 0.0
        %623 = vmatpush1.msra.mxu0 0.0
        %624 = vmatprep.subr.mxu0 0.0
        %625 = vmatpush1.msra.mxu0 0.0
        %626 = vmatprep.subr.mxu0 0.0
        %627 = vmatpush1.msra.mxu0 0.0
        %628 = vmatprep.subr.mxu0 0.0
        %629 = vmatpush1.msra.mxu0 0.0
        %630 = vmatprep.subr.mxu0 0.0
        %631 = vmatpush1.msra.mxu0 0.0
        %632 = vmatprep.subr.mxu0 0.0
        %633 = vmatpush1.msra.mxu0 0.0
        %634 = vmatprep.subr.mxu0 0.0
        %635 = vmatpush1.msra.mxu0 0.0
        %636 = vmatprep.subr.mxu0 0.0
        %637 = vmatpush1.msra.mxu0 0.0
        %638 = vmatprep.subr.mxu0 0.0
        %639 = vmatpush1.msra.mxu0 0.0
        %640 = vmatprep.subr.mxu0 0.0
        %641 = vmatpush1.msra.mxu0 0.0
        %642 = vmatprep.subr.mxu0 0.0
        %643 = vmatpush1.msra.mxu0 0.0
        %644 = vmatprep.subr.mxu0 0.0
        %645 = vmatpush1.msra.mxu0 0.0
        %646 = vmatprep.subr.mxu0 0.0
        %647 = vmatpush1.msra.mxu0 0.0
        %648 = vmatprep.mubr.f32.mxu0 0.0
        %649 = vmatmul.mubr.f32.gmra.mrb[0].mxu0 %v573
        %v650 = vpop.f32.mrb[0].mxu0
        %v651 = vadd.f32 0.0, %v650
        %v652 = vpop.f32.mrb[0].mxu0
        %653 = vmatprep.mubr.f32.mxu0 0.0
        %654 = vmatmul.mubr.f32.gmra.mrb[0].mxu0 %v576
        %v655 = vpop.f32.mrb[0].mxu0
        %v656 = vadd.f32 0.0, %v655
        %v657 = vpop.f32.mrb[0].mxu0
        %658 = vmatprep.mubr.f32.mxu0 0.0
        %659 = vmatmul.mubr.f32.gmra.mrb[0].mxu0 %v579
        %v660 = vpop.f32.mrb[0].mxu0
        %v661 = vadd.f32 0.0, %v660
        %v662 = vpop.f32.mrb[0].mxu0
        %663 = vmatprep.mubr.f32.mxu0 0.0
        %664 = vmatmul.mubr.f32.gmra.mrb[0].mxu0 %v582
        %v665 = vpop.f32.mrb[0].mxu0
        %v666 = vadd.f32 0.0, %v665
        %v667 = vpop.f32.mrb[0].mxu0
        %668 = vdwg.mxu0
        %v669 = vld [vmem:[%s0] sm:$0xff]
        %v670 = vld [vmem:[%s0 + $0x8] sm:$0xff]
        %v671 = vld [vmem:[%s0 + $0x10] sm:$0xff]
        %v672 = vld [vmem:[%s0 + $0x18] sm:$0xff]
        %v673 = vmul.f32 %v651, %v669
        %v674 = vmul.f32 %v656, %v670
        %v675 = vmul.f32 %v661, %v671
        %v676 = vmul.f32 %v666, %v672
        %v678 = vsel %vm454, %v485, 0
        %v681 = vsel %vm454, %v486, 0
        %v684 = vsel %vm454, %v487, 0
        %v687 = vsel %vm454, %v488, 0
        %v690 = vsel %vm454, %v489, 0
        %v693 = vsel %vm454, %v490, 0
        %v696 = vsel %vm454, %v491, 0
        %v699 = vsel %vm454, %v492, 0
        %701 = vmatprep.subr.mxu0 0.0
        %702 = vmatpush1.msra.mxu0 %v673
        %703 = vmatprep.subr.mxu0 0.0
        %704 = vmatpush1.msra.mxu0 %v674
        %705 = vmatprep.subr.mxu0 0.0
        %706 = vmatpush1.msra.mxu0 %v675
        %707 = vmatprep.subr.mxu0 0.0
        %708 = vmatpush1.msra.mxu0 %v676
        %709 = vmatprep.subr.mxu0 0.0
        %710 = vmatpush1.msra.mxu0 0.0
        %711 = vmatprep.subr.mxu0 0.0
        %712 = vmatpush1.msra.mxu0 0.0
        %713 = vmatprep.subr.mxu0 0.0
        %714 = vmatpush1.msra.mxu0 0.0
        %715 = vmatprep.subr.mxu0 0.0
        %716 = vmatpush1.msra.mxu0 0.0
        %717 = vmatprep.subr.mxu0 0.0
        %718 = vmatpush1.msra.mxu0 0.0
        %719 = vmatprep.subr.mxu0 0.0
        %720 = vmatpush1.msra.mxu0 0.0
        %721 = vmatprep.subr.mxu0 0.0
        %722 = vmatpush1.msra.mxu0 0.0
        %723 = vmatprep.subr.mxu0 0.0
        %724 = vmatpush1.msra.mxu0 0.0
        %725 = vmatprep.subr.mxu0 0.0
        %726 = vmatpush1.msra.mxu0 0.0
        %727 = vmatprep.subr.mxu0 0.0
        %728 = vmatpush1.msra.mxu0 0.0
        %729 = vmatprep.subr.mxu0 0.0
        %730 = vmatpush1.msra.mxu0 0.0
        %731 = vmatprep.subr.mxu0 0.0
        %732 = vmatpush1.msra.mxu0 0.0
        %733 = vmatprep.subr.mxu0 0.0
        %734 = vmatpush1.msra.mxu0 0.0
        %735 = vmatprep.subr.mxu0 0.0
        %736 = vmatpush1.msra.mxu0 0.0
        %737 = vmatprep.subr.mxu0 0.0
        %738 = vmatpush1.msra.mxu0 0.0
        %739 = vmatprep.subr.mxu0 0.0
        %740 = vmatpush1.msra.mxu0 0.0
        %741 = vmatprep.subr.mxu0 0.0
        %742 = vmatpush1.msra.mxu0 0.0
        %743 = vmatprep.subr.mxu0 0.0
        %744 = vmatpush1.msra.mxu0 0.0
        %745 = vmatprep.subr.mxu0 0.0
        %746 = vmatpush1.msra.mxu0 0.0
        %747 = vmatprep.subr.mxu0 0.0
        %748 = vmatpush1.msra.mxu0 0.0
        %749 = vmatprep.subr.mxu0 0.0
        %750 = vmatpush1.msra.mxu0 0.0
        %751 = vmatprep.subr.mxu0 0.0
        %752 = vmatpush1.msra.mxu0 0.0
        %753 = vmatprep.subr.mxu0 0.0
        %754 = vmatpush1.msra.mxu0 0.0
        %755 = vmatprep.subr.mxu0 0.0
        %756 = vmatpush1.msra.mxu0 0.0
        %757 = vmatprep.subr.mxu0 0.0
        %758 = vmatpush1.msra.mxu0 0.0
        %759 = vmatprep.subr.mxu0 0.0
        %760 = vmatpush1.msra.mxu0 0.0
        %761 = vmatprep.subr.mxu0 0.0
        %762 = vmatpush1.msra.mxu0 0.0
        %763 = vmatprep.subr.mxu0 0.0
        %764 = vmatpush1.msra.mxu0 0.0
        %765 = vmatprep.mubr.f32.mxu0 0.0
        %766 = vmatmul.mubr.f32.gmra.mrb[0].mxu0 %v678
        %v767 = vpop.f32.mrb[0].mxu0
        %v768 = vadd.f32 %v438, %v767
        %v769 = vpop.f32.mrb[0].mxu0
        %770 = vmatprep.mubr.f32.mxu0 0.0
        %771 = vmatmul.mubr.f32.gmra.mrb[0].mxu0 %v681
        %v772 = vpop.f32.mrb[0].mxu0
        %v773 = vadd.f32 %v439, %v772
        %v774 = vpop.f32.mrb[0].mxu0
        %775 = vmatprep.mubr.f32.mxu0 0.0
        %776 = vmatmul.mubr.f32.gmra.mrb[0].mxu0 %v684
        %v777 = vpop.f32.mrb[0].mxu0
        %v778 = vadd.f32 %v440, %v777
        %v779 = vpop.f32.mrb[0].mxu0
        %780 = vmatprep.mubr.f32.mxu0 0.0
        %781 = vmatmul.mubr.f32.gmra.mrb[0].mxu0 %v687
        %v782 = vpop.f32.mrb[0].mxu0
        %v783 = vadd.f32 %v441, %v782
        %v784 = vpop.f32.mrb[0].mxu0
        %785 = vmatprep.mubr.f32.mxu0 0.0
        %786 = vmatmul.mubr.f32.gmra.mrb[0].mxu0 %v690
        %v787 = vpop.f32.mrb[0].mxu0
        %v788 = vadd.f32 %v442, %v787
        %v789 = vpop.f32.mrb[0].mxu0
        %790 = vmatprep.mubr.f32.mxu0 0.0
        %791 = vmatmul.mubr.f32.gmra.mrb[0].mxu0 %v693
        %v792 = vpop.f32.mrb[0].mxu0
        %v793 = vadd.f32 %v443, %v792
        %v794 = vpop.f32.mrb[0].mxu0
        %795 = vmatprep.mubr.f32.mxu0 0.0
        %796 = vmatmul.mubr.f32.gmra.mrb[0].mxu0 %v696
        %v797 = vpop.f32.mrb[0].mxu0
        %v798 = vadd.f32 %v444, %v797
        %v799 = vpop.f32.mrb[0].mxu0
        %800 = vmatprep.mubr.f32.mxu0 0.0
        %801 = vmatmul.mubr.f32.gmra.mrb[0].mxu0 %v699
        %v802 = vpop.f32.mrb[0].mxu0
        %v803 = vadd.f32 %v445, %v802
        %v804 = vpop.f32.mrb[0].mxu0
        %805 = vdwg.mxu0
        %v806 = vld [vmem:[%s1] sm:$0xff]
        %v807 = vld [vmem:[%s1 + $0x8] sm:$0xff]
        %v808 = vld [vmem:[%s1 + $0x10] sm:$0xff]
        %v809 = vld [vmem:[%s1 + $0x18] sm:$0xff]
        %v810 = vld [vmem:[%s2] sm:$0x1]
        %v812 = vlaneseq
        %v813 = vshrl.u32 %v812, 7
        %v814 = vsub.s32 0, %v813
        %v815 = vrot.slane %v810, %v814
        %v818 = vsel %vm454, %v768, 0
        %v821 = vsel %vm454, %v773, 0
        %v824 = vsel %vm454, %v778, 0
        %v827 = vsel %vm454, %v783, 0
        %v830 = vsel %vm454, %v788, 0
        %v833 = vsel %vm454, %v793, 0
        %v836 = vsel %vm454, %v798, 0
        %v839 = vsel %vm454, %v803, 0
        %841 = vmatprep.subr.mxu0 0.0
        %842 = vmatpush1.msra.mxu0 %v806
        %843 = vmatprep.subr.mxu0 0.0
        %844 = vmatpush1.msra.mxu0 %v807
        %845 = vmatprep.subr.mxu0 0.0
        %846 = vmatpush1.msra.mxu0 %v808
        %847 = vmatprep.subr.mxu0 0.0
        %848 = vmatpush1.msra.mxu0 %v809
        %849 = vmatprep.subr.mxu0 0.0
        %850 = vmatpush1.msra.mxu0 0.0
        %851 = vmatprep.subr.mxu0 0.0
        %852 = vmatpush1.msra.mxu0 0.0
        %853 = vmatprep.subr.mxu0 0.0
        %854 = vmatpush1.msra.mxu0 0.0
        %855 = vmatprep.subr.mxu0 0.0
        %856 = vmatpush1.msra.mxu0 0.0
        %857 = vmatprep.subr.mxu0 0.0
        %858 = vmatpush1.msra.mxu0 0.0
        %859 = vmatprep.subr.mxu0 0.0
        %860 = vmatpush1.msra.mxu0 0.0
        %861 = vmatprep.subr.mxu0 0.0
        %862 = vmatpush1.msra.mxu0 0.0
        %863 = vmatprep.subr.mxu0 0.0
        %864 = vmatpush1.msra.mxu0 0.0
        %865 = vmatprep.subr.mxu0 0.0
        %866 = vmatpush1.msra.mxu0 0.0
        %867 = vmatprep.subr.mxu0 0.0
        %868 = vmatpush1.msra.mxu0 0.0
        %869 = vmatprep.subr.mxu0 0.0
        %870 = vmatpush1.msra.mxu0 0.0
        %871 = vmatprep.subr.mxu0 0.0
        %872 = vmatpush1.msra.mxu0 0.0
        %873 = vmatprep.subr.mxu0 0.0
        %874 = vmatpush1.msra.mxu0 0.0
        %875 = vmatprep.subr.mxu0 0.0
        %876 = vmatpush1.msra.mxu0 0.0
        %877 = vmatprep.subr.mxu0 0.0
        %878 = vmatpush1.msra.mxu0 0.0
        %879 = vmatprep.subr.mxu0 0.0
        %880 = vmatpush1.msra.mxu0 0.0
        %881 = vmatprep.subr.mxu0 0.0
        %882 = vmatpush1.msra.mxu0 0.0
        %883 = vmatprep.subr.mxu0 0.0
        %884 = vmatpush1.msra.mxu0 0.0
        %885 = vmatprep.subr.mxu0 0.0
        %886 = vmatpush1.msra.mxu0 0.0
        %887 = vmatprep.subr.mxu0 0.0
        %888 = vmatpush1.msra.mxu0 0.0
        %889 = vmatprep.subr.mxu0 0.0
        %890 = vmatpush1.msra.mxu0 0.0
        %891 = vmatprep.subr.mxu0 0.0
        %892 = vmatpush1.msra.mxu0 0.0
        %893 = vmatprep.subr.mxu0 0.0
        %894 = vmatpush1.msra.mxu0 0.0
        %895 = vmatprep.subr.mxu0 0.0
        %896 = vmatpush1.msra.mxu0 0.0
        %897 = vmatprep.subr.mxu0 0.0
        %898 = vmatpush1.msra.mxu0 0.0
        %899 = vmatprep.subr.mxu0 0.0
        %900 = vmatpush1.msra.mxu0 0.0
        %901 = vmatprep.subr.mxu0 0.0
        %902 = vmatpush1.msra.mxu0 0.0
        %903 = vmatprep.subr.mxu0 0.0
        %904 = vmatpush1.msra.mxu0 0.0
        %905 = vmatprep.mubr.f32.mxu0 0.0
        %906 = vmatmul.mubr.f32.gmra.mrb[0].mxu0 %v818
        %v907 = vpop.f32.mrb[0].mxu0
        %v908 = vadd.f32 %v815, %v907
        %v909 = vpop.f32.mrb[0].mxu0
        %910 = vmatprep.mubr.f32.mxu0 0.0
        %911 = vmatmul.mubr.f32.gmra.mrb[0].mxu0 %v821
        %v912 = vpop.f32.mrb[0].mxu0
        %v913 = vadd.f32 %v815, %v912
        %v914 = vpop.f32.mrb[0].mxu0
        %915 = vmatprep.mubr.f32.mxu0 0.0
        %916 = vmatmul.mubr.f32.gmra.mrb[0].mxu0 %v824
        %v917 = vpop.f32.mrb[0].mxu0
        %v918 = vadd.f32 %v815, %v917
        %v919 = vpop.f32.mrb[0].mxu0
        %920 = vmatprep.mubr.f32.mxu0 0.0
        %921 = vmatmul.mubr.f32.gmra.mrb[0].mxu0 %v827
        %v922 = vpop.f32.mrb[0].mxu0
        %v923 = vadd.f32 %v815, %v922
        %v924 = vpop.f32.mrb[0].mxu0
        %925 = vmatprep.mubr.f32.mxu0 0.0
        %926 = vmatmul.mubr.f32.gmra.mrb[0].mxu0 %v830
        %v927 = vpop.f32.mrb[0].mxu0
        %v928 = vadd.f32 %v815, %v927
        %v929 = vpop.f32.mrb[0].mxu0
        %930 = vmatprep.mubr.f32.mxu0 0.0
        %931 = vmatmul.mubr.f32.gmra.mrb[0].mxu0 %v833
        %v932 = vpop.f32.mrb[0].mxu0
        %v933 = vadd.f32 %v815, %v932
        %v934 = vpop.f32.mrb[0].mxu0
        %935 = vmatprep.mubr.f32.mxu0 0.0
        %936 = vmatmul.mubr.f32.gmra.mrb[0].mxu0 %v836
        %v937 = vpop.f32.mrb[0].mxu0
        %v938 = vadd.f32 %v815, %v937
        %v939 = vpop.f32.mrb[0].mxu0
        %940 = vmatprep.mubr.f32.mxu0 0.0
        %941 = vmatmul.mubr.f32.gmra.mrb[0].mxu0 %v839
        %v942 = vpop.f32.mrb[0].mxu0
        %v943 = vadd.f32 %v815, %v942
        %v944 = vpop.f32.mrb[0].mxu0
        %945 = vdwg.mxu0
        %946 = vst.msk [vmem:[%s406] sm:$0xff] %vm454, %v908
        %947 = vst.msk [vmem:[%s406 + $0x8] sm:$0xff] %vm454, %v913
        %948 = vst.msk [vmem:[%s406 + $0x10] sm:$0xff] %vm454, %v918
        %949 = vst.msk [vmem:[%s406 + $0x18] sm:$0xff] %vm454, %v923
        %950 = vst.msk [vmem:[%s406 + $0x20] sm:$0xff] %vm454, %v928
        %951 = vst.msk [vmem:[%s406 + $0x28] sm:$0xff] %vm454, %v933
        %952 = vst.msk [vmem:[%s406 + $0x30] sm:$0xff] %vm454, %v938
        %953 = vst.msk [vmem:[%s406 + $0x38] sm:$0xff] %vm454, %v943
        %954 = vst.msk [vmem:[%s411] sm:$0xff] %vm454, %v673
        %955 = vst.msk [vmem:[%s411 + $0x8] sm:$0xff] %vm454, %v674
        %956 = vst.msk [vmem:[%s411 + $0x10] sm:$0xff] %vm454, %v675
        %957 = vst.msk [vmem:[%s411 + $0x18] sm:$0xff] %vm454, %v676
        %p958 = scmp.lt.s32.totalorder %s18, 1
        %s959 = scalar_select %p958, %s18, 1
        %s960 = smul.addr %s959, 8
        %s961 = smul.addr %s960, 8
        %s962 = scalar_lea.vmem %s5, %s961
        %p963 = scmp.lt.s32.totalorder %s18, 1
        %s964 = scalar_select %p963, %s18, 1
        %s965 = smul.addr %s964, 4
        %s966 = smul.addr %s965, 8
        %s967 = scalar_lea.vmem %s6, %s966
        // Predicated region
        $region79: #{attention_forward.5} parent=73 // pred_check
          %p968 = pneg %p151
        $region80: #{attention_forward.5} parent=73 // pred_check_branch
          %970 = sbr.rel (%p968) target = $region82
        $region81: #{attention_forward.5} parent=73 // pred_region
          _
        $region82: #{attention_forward.5} parent=73 // pred_fallthru
          _
        // Predicated region
        $region83: #{attention_forward.5} parent=73 // pred_check
          %p971 = pneg %p177
        $region84: #{attention_forward.5} parent=73 // pred_check_branch
          %973 = sbr.rel (%p971) target = $region86
        $region85: #{attention_forward.5} parent=73 // pred_region
          _
        $region86: #{attention_forward.5} parent=73 // pred_fallthru
          _
      $region74: #{attention_forward.5} parent=5 // pred_fallthru
        _
      %p974 = scmp.le.s32.totalorder 2, %s13
      // Predicated region
      $region87: #{attention_forward.5} parent=5 // pred_check
        %p975 = pneg %p974
      $region88: #{attention_forward.5} parent=5 // pred_check_branch
        %977 = sbr.rel (%p975) target = $region90
      $region89: #{attention_forward.5} parent=5 // pred_region
        %s978 = ssub.s32 %s13, 2
        // Predicated region
        $region91: #{attention_forward.5} parent=89 // pred_check
          %p979 = pneg %p157
        $region92: #{attention_forward.5} parent=89 // pred_check_branch
          %981 = sbr.rel (%p979) target = $region94
        $region93: #{attention_forward.5} parent=89 // pred_region
          %p982 = scmp.lt.s32.totalorder %s19, 1
          %s983 = scalar_select %p982, %s19, 1
          %s984 = smul.addr %s983, 8
          %s985 = smul.addr %s984, 8
          %s986 = scalar_lea.vmem %s5, %s985
        $region94: #{attention_forward.5} parent=89 // pred_fallthru
          _
        // Predicated region
        $region95: #{attention_forward.5} parent=89 // pred_check
          %p987 = pneg %p183
        $region96: #{attention_forward.5} parent=89 // pred_check_branch
          %989 = sbr.rel (%p987) target = $region98
        $region97: #{attention_forward.5} parent=89 // pred_region
          %p990 = scmp.lt.s32.totalorder %s19, 1
          %s991 = scalar_select %p990, %s19, 1
          %s992 = smul.addr %s991, 4
          %s993 = smul.addr %s992, 8
          %s994 = scalar_lea.vmem %s6, %s993
        $region98: #{attention_forward.5} parent=89 // pred_fallthru
          _
      $region90: #{attention_forward.5} parent=5 // pred_fallthru
        _
    $region6: #{attention_forward.5} parent=1 // loop_footer
      %s17 = sadd.s32 1, %s13
    $region7: #{attention_forward.5} parent=1 // loop_footer_branch
      %12 = sbr.rel target = $region3
    $region8: #{attention_forward.5} parent=1 // loop_exit
      _

// kernel: attention_forward.4
$region0: #{attention_forward.4}
  #allocation0 [shape = 'u32[]', space=smem, size = 0x4, offset = 0x4, fixed_abs, tag = 'smem constant byte address 0x4 - core index']
  #allocation1 [shape = 'u32[144,128]{1,0:T(1,128)}', space=vmem, size = 0x12000, scoped, tag = 'internal scratch']
  %s0 = inlined_call_operand.vmem [shape: f32[2,10,10,32], index: 0, kind: input, shape index: {}]
  %s1 = inlined_call_operand.vmem [shape: f32[3,3,32], index: 1, kind: input, shape index: {}]
  %s2 = inlined_call_operand.vmem [shape: f32[1,32], index: 2, kind: input, shape index: {}]
  %s3 = inlined_call_operand.vmem [shape: f32[2,8,8,32], index: 3, kind: output, shape index: {}]
  %s4 = sld [smem:[#allocation0]]
  $region45: #{attention_forward.4} parent=0
    _
  %s6 = ssub.s32 1, %s4
  %s7 = scalar_select 0, %s6, %s4
  loop: start=0, step=1, limit=4
  $region2: #{attention_forward.4} parent=0 // loop_pre_header
    _
  $region3: #{attention_forward.4} parent=0 // loop_header
    %s9 = sphi 0, %s13
    %p10 = scmp.ge.s32.totalorder %s9, 4
    %s19 = sphi 0, %s21
    %s22 = sphi 0, %s19
    %s23 = sphi 0, %s22
    %s39 = sphi 0, %s23
    %s43 = sphi 0, %s43
    %s45 = sphi 0, %s43
    %s46 = sphi 0, %s45
    %s60 = sphi 0, %s46
    %s64 = sphi 0, %s64
    %s66 = sphi 0, %s64
    %s67 = sphi 0, %s66
    %s81 = sphi 0, %s67
    %s87 = sphi 0, %s89
    %s90 = sphi 0, %s87
    %s91 = sphi 0, %s90
    %s107 = sphi 0, %s91
  $region4: #{attention_forward.4} parent=0 // loop_header_branch
    %12 = sbr.rel (%p10) target = $region8
  $region5: #{attention_forward.4} parent=0 // loop_body
    %s14 = ssub.s32 %s9, 1
    %s15 = ssub.s32 %s9, 2
    %s16 = sadd.s32 %s9, 1
    %s17 = ssub.s32 %s9, %s16
    %p18 = scmp.eq.s32.totalorder %s17, 0
    %s20 = sadd.s32 %s19, 1
    %s21 = scalar_select %p18, %s19, %s20
    %p24 = pneg %p18
    %p25 = scmp.eq.s32.totalorder %s9, 1
    %p26 = por %p24, %p25
    %p27 = scmp.ne.s32.totalorder %s19, %s22
    %p28 = scmp.eq.s32.totalorder %s9, 0
    %p29 = por %p27, %p28
    %p30 = scmp.ne.s32.totalorder %s19, %s22
    %p31 = scmp.eq.s32.totalorder %s14, 1
    %p32 = por %p30, %p31
    %p33 = scmp.ne.s32.totalorder %s22, %s23
    %p34 = scmp.eq.s32.totalorder %s14, 0
    %p35 = por %p33, %p34
    %p36 = scmp.ne.s32.totalorder %s22, %s23
    %p37 = scmp.eq.s32.totalorder %s15, 1
    %p38 = por %p36, %p37
    %p40 = scmp.ne.s32.totalorder %s23, %s39
    %p41 = scmp.eq.s32.totalorder %s15, 0
    %p42 = por %p40, %p41
    %s44 = sadd.s32 %s43, 1
    %p47 = scmp.eq.s32.totalorder %s9, 1
    %p48 = scmp.ne.s32.totalorder %s43, %s45
    %p49 = scmp.eq.s32.totalorder %s9, 0
    %p50 = por %p48, %p49
    %p51 = scmp.ne.s32.totalorder %s43, %s45
    %p52 = scmp.eq.s32.totalorder %s14, 1
    %p53 = por %p51, %p52
    %p54 = scmp.ne.s32.totalorder %s45, %s46
    %p55 = scmp.eq.s32.totalorder %s14, 0
    %p56 = por %p54, %p55
    %p57 = scmp.ne.s32.totalorder %s45, %s46
    %p58 = scmp.eq.s32.totalorder %s15, 1
    %p59 = por %p57, %p58
    %p61 = scmp.ne.s32.totalorder %s46, %s60
    %p62 = scmp.eq.s32.totalorder %s15, 0
    %p63 = por %p61, %p62
    %s65 = sadd.s32 %s64, 1
    %p68 = scmp.eq.s32.totalorder %s9, 1
    %p69 = scmp.ne.s32.totalorder %s64, %s66
    %p70 = scmp.eq.s32.totalorder %s9, 0
    %p71 = por %p69, %p70
    %p72 = scmp.ne.s32.totalorder %s64, %s66
    %p73 = scmp.eq.s32.totalorder %s14, 1
    %p74 = por %p72, %p73
    %p75 = scmp.ne.s32.totalorder %s66, %s67
    %p76 = scmp.eq.s32.totalorder %s14, 0
    %p77 = por %p75, %p76
    %p78 = scmp.ne.s32.totalorder %s66, %s67
    %p79 = scmp.eq.s32.totalorder %s15, 1
    %p80 = por %p78, %p79
    %p82 = scmp.ne.s32.totalorder %s67, %s81
    %p83 = scmp.eq.s32.totalorder %s15, 0
    %p84 = por %p82, %p83
    %s85 = ssub.s32 %s9, %s16
    %p86 = scmp.eq.s32.totalorder %s85, 0
    %s88 = sadd.s32 %s87, 1
    %s89 = scalar_select %p86, %s87, %s88
    %p92 = pneg %p86
    %p93 = scmp.eq.s32.totalorder %s9, 1
    %p94 = por %p92, %p93
    %p95 = scmp.ne.s32.totalorder %s87, %s90
    %p96 = scmp.eq.s32.totalorder %s9, 0
    %p97 = por %p95, %p96
    %p98 = scmp.ne.s32.totalorder %s87, %s90
    %p99 = scmp.eq.s32.totalorder %s14, 1
    %p100 = por %p98, %p99
    %p101 = scmp.ne.s32.totalorder %s90, %s91
    %p102 = scmp.eq.s32.totalorder %s14, 0
    %p103 = por %p101, %p102
    %p104 = scmp.ne.s32.totalorder %s90, %s91
    %p105 = scmp.eq.s32.totalorder %s15, 1
    %p106 = por %p104, %p105
    %p108 = scmp.ne.s32.totalorder %s91, %s107
    %p109 = scmp.eq.s32.totalorder %s15, 0
    %p110 = por %p108, %p109
    %p111 = scmp.le.s32.totalorder 1, %s9
    %p112 = scmp.lt.s32.totalorder %s9, 3
    %p113 = pnand %p111, %p112
    %p114 = pneg %p113
    // Predicated region
    $region9: #{attention_forward.4} parent=5 // pred_check
      _
    $region10: #{attention_forward.4} parent=5 // pred_check_branch
      %116 = sbr.rel (%p113) target = $region12
    $region11: #{attention_forward.4} parent=5 // pred_region
      %s117 = ssub.s32 %s9, 1
      // Predicated region
      $region13: #{attention_forward.4} parent=11 // pred_check
        %p118 = pneg %p56
      $region14: #{attention_forward.4} parent=11 // pred_check_branch
        %120 = sbr.rel (%p118) target = $region16
      $region15: #{attention_forward.4} parent=11 // pred_region
        _
      $region16: #{attention_forward.4} parent=11 // pred_fallthru
        _
      // Predicated region
      $region17: #{attention_forward.4} parent=11 // pred_check
        %p121 = pneg %p77
      $region18: #{attention_forward.4} parent=11 // pred_check_branch
        %123 = sbr.rel (%p121) target = $region20
      $region19: #{attention_forward.4} parent=11 // pred_region
        _
      $region20: #{attention_forward.4} parent=11 // pred_fallthru
        _
    $region12: #{attention_forward.4} parent=5 // pred_fallthru
      _
    %p124 = scmp.lt.s32.totalorder %s9, 2
    // Predicated region
    $region21: #{attention_forward.4} parent=5 // pred_check
      %p125 = pneg %p124
    $region22: #{attention_forward.4} parent=5 // pred_check_branch
      %127 = sbr.rel (%p125) target = $region24
    $region23: #{attention_forward.4} parent=5 // pred_region
      // Predicated region
      $region25: #{attention_forward.4} parent=23 // pred_check
        %p128 = pneg %p29
      $region26: #{attention_forward.4} parent=23 // pred_check_branch
        %130 = sbr.rel (%p128) target = $region28
      $region27: #{attention_forward.4} parent=23 // pred_region
        %p131 = scmp.lt.s32.totalorder %s9, 1
        %s132 = scalar_select %p131, %s9, 1
        %s133 = smul.addr %s132, 20
        %s134 = smul.addr %s133, 8
        %s135 = scalar_lea.vmem %s0, %s134
      $region28: #{attention_forward.4} parent=23 // pred_fallthru
        _
    $region24: #{attention_forward.4} parent=5 // pred_fallthru
      _
    %p136 = scmp.le.s32.totalorder 1, %s9
    %p137 = scmp.lt.s32.totalorder %s9, 3
    %p138 = pnand %p136, %p137
    %p139 = pneg %p138
    // Predicated region
    $region29: #{attention_forward.4} parent=5 // pred_check
      _
    $region30: #{attention_forward.4} parent=5 // pred_check_branch
      %141 = sbr.rel (%p138) target = $region32
    $region31: #{attention_forward.4} parent=5 // pred_region
      %s142 = ssub.s32 %s9, 1
      %p143 = scmp.lt.s32.totalorder %s14, 1
      %s144 = scalar_select %p143, %s14, 1
      %s145 = smul.addr %s144, 20
      %s146 = smul.addr %s145, 8
      %s147 = scalar_lea.vmem %s0, %s146
      %p148 = pneg %p35
      %p149 = pneg %p32
      %p150 = pneg %p56
      %p151 = pneg %p53
      %p152 = pneg %p77
      %p153 = pneg %p74
      %p154 = pneg %p103
      %p155 = pneg %p100
      %p156 = scmp.lt.s32.totalorder %s14, 1
      %s157 = scalar_select %p156, %s14, 1
      %s158 = smul.addr %s157, 8
      %s159 = smul.addr %s158, 8
      %s160 = scalar_lea.vmem %s3, %s159
      %p161 = scmp.lt.s32.totalorder %s14, 1
      %s162 = scalar_select %p161, %s14, 1
      %s163 = smul.addr %s162, 20
      %s164 = smul.addr %s163, 8
      %s165 = scalar_lea.vmem %s0, %s164
      %p166 = scmp.lt.s32.totalorder %s14, 1
      %s167 = scalar_select %p166, %s14, 1
      %s168 = smul.addr %s167, 8
      %s169 = smul.addr %s168, 8
      %s170 = scalar_lea.vmem %s3, %s169
      %v171 = vld [vmem:[%s165] sm:$0xff]
      %v172 = vld [vmem:[%s165 + $0x10] sm:$0xff]
      %v173 = vld [vmem:[%s165 + $0x20] sm:$0xff]
      %v174 = vld [vmem:[%s165 + $0x30] sm:$0xff]
      %v175 = vld [vmem:[%s165 + $0x40] sm:$0xff]
      %v176 = vld [vmem:[%s165 + $0x50] sm:$0xff]
      %v177 = vld [vmem:[%s165 + $0x60] sm:$0xff]
      %v178 = vld [vmem:[%s165 + $0x70] sm:$0xff]
      %v179 = vld [vmem:[%s1] sm:$0x1]
      %v180 = vlaneseq
      %v181 = vshrl.u32 %v180, 7
      %v182 = vsub.s32 0, %v181
      %v183 = vrot.slane %v179, %v182
      %v184 = vmul.f32 %v171, %v183
      %v185 = vmul.f32 %v172, %v183
      %v186 = vmul.f32 %v173, %v183
      %v187 = vmul.f32 %v174, %v183
      %v188 = vmul.f32 %v175, %v183
      %v189 = vmul.f32 %v176, %v183
      %v190 = vmul.f32 %v177, %v183
      %v191 = vmul.f32 %v178, %v183
      %v192 = vadd.f32 %v184, 0.0
      %v193 = vadd.f32 %v185, 0.0
      %v194 = vadd.f32 %v186, 0.0
      %v195 = vadd.f32 %v187, 0.0
      %v196 = vadd.f32 %v188, 0.0
      %v197 = vadd.f32 %v189, 0.0
      %v198 = vadd.f32 %v190, 0.0
      %v199 = vadd.f32 %v191, 0.0
      %v200 = vld [vmem:[%s165 + $0x1] sm:$0xff]
      %v201 = vld [vmem:[%s165 + $0x11] sm:$0xff]
      %v202 = vld [vmem:[%s165 + $0x21] sm:$0xff]
      %v203 = vld [vmem:[%s165 + $0x31] sm:$0xff]
      %v204 = vld [vmem:[%s165 + $0x41] sm:$0xff]
      %v205 = vld [vmem:[%s165 + $0x51] sm:$0xff]
      %v206 = vld [vmem:[%s165 + $0x61] sm:$0xff]
      %v207 = vld [vmem:[%s165 + $0x71] sm:$0xff]
      %v208 = vld [vmem:[%s1 + $0x1] sm:$0x1]
      %v209 = vlaneseq
      %v210 = vshrl.u32 %v209, 7
      %v211 = vsub.s32 0, %v210
      %v212 = vrot.slane %v208, %v211
      %v213 = vmul.f32 %v200, %v212
      %v214 = vmul.f32 %v201, %v212
      %v215 = vmul.f32 %v202, %v212
      %v216 = vmul.f32 %v203, %v212
      %v217 = vmul.f32 %v204, %v212
      %v218 = vmul.f32 %v205, %v212
      %v219 = vmul.f32 %v206, %v212
      %v220 = vmul.f32 %v207, %v212
      %v221 = vadd.f32 %v192, %v213
      %v222 = vadd.f32 %v193, %v214
      %v223 = vadd.f32 %v194, %v215
      %v224 = vadd.f32 %v195, %v216
      %v225 = vadd.f32 %v196, %v217
      %v226 = vadd.f32 %v197, %v218
      %v227 = vadd.f32 %v198, %v219
      %v228 = vadd.f32 %v199, %v220
      %v229 = vld [vmem:[%s165 + $0x2] sm:$0xff]
      %v230 = vld [vmem:[%s165 + $0x12] sm:$0xff]
      %v231 = vld [vmem:[%s165 + $0x22] sm:$0xff]
      %v232 = vld [vmem:[%s165 + $0x32] sm:$0xff]
      %v233 = vld [vmem:[%s165 + $0x42] sm:$0xff]
      %v234 = vld [vmem:[%s165 + $0x52] sm:$0xff]
      %v235 = vld [vmem:[%s165 + $0x62] sm:$0xff]
      %v236 = vld [vmem:[%s165 + $0x72] sm:$0xff]
      %v237 = vld [vmem:[%s1 + $0x2] sm:$0x1]
      %v238 = vlaneseq
      %v239 = vshrl.u32 %v238, 7
      %v240 = vsub.s32 0, %v239
      %v241 = vrot.slane %v237, %v240
      %v242 = vmul.f32 %v229, %v241
      %v243 = vmul.f32 %v230, %v241
      %v244 = vmul.f32 %v231, %v241
      %v245 = vmul.f32 %v232, %v241
      %v246 = vmul.f32 %v233, %v241
      %v247 = vmul.f32 %v234, %v241
      %v248 = vmul.f32 %v235, %v241
      %v249 = vmul.f32 %v236, %v241
      %v250 = vadd.f32 %v221, %v242
      %v251 = vadd.f32 %v222, %v243
      %v252 = vadd.f32 %v223, %v244
      %v253 = vadd.f32 %v224, %v245
      %v254 = vadd.f32 %v225, %v246
      %v255 = vadd.f32 %v226, %v247
      %v256 = vadd.f32 %v227, %v248
      %v257 = vadd.f32 %v228, %v249
      %s258 = scalar_lea.vmem %s165, 16
      %v259 = vld [vmem:[%s258] sm:$0xff]
      %v260 = vld [vmem:[%s258 + $0x10] sm:$0xff]
      %v261 = vld [vmem:[%s258 + $0x20] sm:$0xff]
      %v262 = vld [vmem:[%s258 + $0x30] sm:$0xff]
      %v263 = vld [vmem:[%s258 + $0x40] sm:$0xff]
      %v264 = vld [vmem:[%s258 + $0x50] sm:$0xff]
      %v265 = vld [vmem:[%s258 + $0x60] sm:$0xff]
      %v266 = vld [vmem:[%s258 + $0x70] sm:$0xff]
      %s267 = scalar_lea.vmem %s1, 4
      %v268 = vld [vmem:[%s267] sm:$0x1]
      %v269 = vlaneseq
      %v270 = vshrl.u32 %v269, 7
      %v271 = vsub.s32 0, %v270
      %v272 = vrot.slane %v268, %v271
      %v273 = vmul.f32 %v259, %v272
      %v274 = vmul.f32 %v260, %v272
      %v275 = vmul.f32 %v261, %v272
      %v276 = vmul.f32 %v262, %v272
      %v277 = vmul.f32 %v263, %v272
      %v278 = vmul.f32 %v264, %v272
      %v279 = vmul.f32 %v265, %v272
      %v280 = vmul.f32 %v266, %v272
      %v281 = vadd.f32 %v250, %v273
      %v282 = vadd.f32 %v251, %v274
      %v283 = vadd.f32 %v252, %v275
      %v284 = vadd.f32 %v253, %v276
      %v285 = vadd.f32 %v254, %v277
      %v286 = vadd.f32 %v255, %v278
      %v287 = vadd.f32 %v256, %v279
      %v288 = vadd.f32 %v257, %v280
      %v289 = vld [vmem:[%s258 + $0x1] sm:$0xff]
      %v290 = vld [vmem:[%s258 + $0x11] sm:$0xff]
      %v291 = vld [vmem:[%s258 + $0x21] sm:$0xff]
      %v292 = vld [vmem:[%s258 + $0x31] sm:$0xff]
      %v293 = vld [vmem:[%s258 + $0x41] sm:$0xff]
      %v294 = vld [vmem:[%s258 + $0x51] sm:$0xff]
      %v295 = vld [vmem:[%s258 + $0x61] sm:$0xff]
      %v296 = vld [vmem:[%s258 + $0x71] sm:$0xff]
      %v297 = vld [vmem:[%s267 + $0x1] sm:$0x1]
      %v298 = vlaneseq
      %v299 = vshrl.u32 %v298, 7
      %v300 = vsub.s32 0, %v299
      %v301 = vrot.slane %v297, %v300
      %v302 = vmul.f32 %v289, %v301
      %v303 = vmul.f32 %v290, %v301
      %v304 = vmul.f32 %v291, %v301
      %v305 = vmul.f32 %v292, %v301
      %v306 = vmul.f32 %v293, %v301
      %v307 = vmul.f32 %v294, %v301
      %v308 = vmul.f32 %v295, %v301
      %v309 = vmul.f32 %v296, %v301
      %v310 = vadd.f32 %v281, %v302
      %v311 = vadd.f32 %v282, %v303
      %v312 = vadd.f32 %v283, %v304
      %v313 = vadd.f32 %v284, %v305
      %v314 = vadd.f32 %v285, %v306
      %v315 = vadd.f32 %v286, %v307
      %v316 = vadd.f32 %v287, %v308
      %v317 = vadd.f32 %v288, %v309
      %v318 = vld [vmem:[%s258 + $0x2] sm:$0xff]
      %v319 = vld [vmem:[%s258 + $0x12] sm:$0xff]
      %v320 = vld [vmem:[%s258 + $0x22] sm:$0xff]
      %v321 = vld [vmem:[%s258 + $0x32] sm:$0xff]
      %v322 = vld [vmem:[%s258 + $0x42] sm:$0xff]
      %v323 = vld [vmem:[%s258 + $0x52] sm:$0xff]
      %v324 = vld [vmem:[%s258 + $0x62] sm:$0xff]
      %v325 = vld [vmem:[%s258 + $0x72] sm:$0xff]
      %v326 = vld [vmem:[%s267 + $0x2] sm:$0x1]
      %v327 = vlaneseq
      %v328 = vshrl.u32 %v327, 7
      %v329 = vsub.s32 0, %v328
      %v330 = vrot.slane %v326, %v329
      %v331 = vmul.f32 %v318, %v330
      %v332 = vmul.f32 %v319, %v330
      %v333 = vmul.f32 %v320, %v330
      %v334 = vmul.f32 %v321, %v330
      %v335 = vmul.f32 %v322, %v330
      %v336 = vmul.f32 %v323, %v330
      %v337 = vmul.f32 %v324, %v330
      %v338 = vmul.f32 %v325, %v330
      %v339 = vadd.f32 %v310, %v331
      %v340 = vadd.f32 %v311, %v332
      %v341 = vadd.f32 %v312, %v333
      %v342 = vadd.f32 %v313, %v334
      %v343 = vadd.f32 %v314, %v335
      %v344 = vadd.f32 %v315, %v336
      %v345 = vadd.f32 %v316, %v337
      %v346 = vadd.f32 %v317, %v338
      %s347 = scalar_lea.vmem %s165, 32
      %v348 = vld [vmem:[%s347] sm:$0xff]
      %v349 = vld [vmem:[%s347 + $0x10] sm:$0xff]
      %v350 = vld [vmem:[%s347 + $0x20] sm:$0xff]
      %v351 = vld [vmem:[%s347 + $0x30] sm:$0xff]
      %v352 = vld [vmem:[%s347 + $0x40] sm:$0xff]
      %v353 = vld [vmem:[%s347 + $0x50] sm:$0xff]
      %v354 = vld [vmem:[%s347 + $0x60] sm:$0xff]
      %v355 = vld [vmem:[%s347 + $0x70] sm:$0xff]
      %s356 = scalar_lea.vmem %s1, 8
      %v357 = vld [vmem:[%s356] sm:$0x1]
      %v358 = vlaneseq
      %v359 = vshrl.u32 %v358, 7
      %v360 = vsub.s32 0, %v359
      %v361 = vrot.slane %v357, %v360
      %v362 = vmul.f32 %v348, %v361
      %v363 = vmul.f32 %v349, %v361
      %v364 = vmul.f32 %v350, %v361
      %v365 = vmul.f32 %v351, %v361
      %v366 = vmul.f32 %v352, %v361
      %v367 = vmul.f32 %v353, %v361
      %v368 = vmul.f32 %v354, %v361
      %v369 = vmul.f32 %v355, %v361
      %v370 = vadd.f32 %v339, %v362
      %v371 = vadd.f32 %v340, %v363
      %v372 = vadd.f32 %v341, %v364
      %v373 = vadd.f32 %v342, %v365
      %v374 = vadd.f32 %v343, %v366
      %v375 = vadd.f32 %v344, %v367
      %v376 = vadd.f32 %v345, %v368
      %v377 = vadd.f32 %v346, %v369
      %v378 = vld [vmem:[%s347 + $0x1] sm:$0xff]
      %v379 = vld [vmem:[%s347 + $0x11] sm:$0xff]
      %v380 = vld [vmem:[%s347 + $0x21] sm:$0xff]
      %v381 = vld [vmem:[%s347 + $0x31] sm:$0xff]
      %v382 = vld [vmem:[%s347 + $0x41] sm:$0xff]
      %v383 = vld [vmem:[%s347 + $0x51] sm:$0xff]
      %v384 = vld [vmem:[%s347 + $0x61] sm:$0xff]
      %v385 = vld [vmem:[%s347 + $0x71] sm:$0xff]
      %v386 = vld [vmem:[%s356 + $0x1] sm:$0x1]
      %v387 = vlaneseq
      %v388 = vshrl.u32 %v387, 7
      %v389 = vsub.s32 0, %v388
      %v390 = vrot.slane %v386, %v389
      %v391 = vmul.f32 %v378, %v390
      %v392 = vmul.f32 %v379, %v390
      %v393 = vmul.f32 %v380, %v390
      %v394 = vmul.f32 %v381, %v390
      %v395 = vmul.f32 %v382, %v390
      %v396 = vmul.f32 %v383, %v390
      %v397 = vmul.f32 %v384, %v390
      %v398 = vmul.f32 %v385, %v390
      %v399 = vadd.f32 %v370, %v391
      %v400 = vadd.f32 %v371, %v392
      %v401 = vadd.f32 %v372, %v393
      %v402 = vadd.f32 %v373, %v394
      %v403 = vadd.f32 %v374, %v395
      %v404 = vadd.f32 %v375, %v396
      %v405 = vadd.f32 %v376, %v397
      %v406 = vadd.f32 %v377, %v398
      %v407 = vld [vmem:[%s347 + $0x2] sm:$0xff]
      %v408 = vld [vmem:[%s347 + $0x12] sm:$0xff]
      %v409 = vld [vmem:[%s347 + $0x22] sm:$0xff]
      %v410 = vld [vmem:[%s347 + $0x32] sm:$0xff]
      %v411 = vld [vmem:[%s347 + $0x42] sm:$0xff]
      %v412 = vld [vmem:[%s347 + $0x52] sm:$0xff]
      %v413 = vld [vmem:[%s347 + $0x62] sm:$0xff]
      %v414 = vld [vmem:[%s347 + $0x72] sm:$0xff]
      %v415 = vld [vmem:[%s356 + $0x2] sm:$0x1]
      %v416 = vlaneseq
      %v417 = vshrl.u32 %v416, 7
      %v418 = vsub.s32 0, %v417
      %v419 = vrot.slane %v415, %v418
      %v420 = vmul.f32 %v407, %v419
      %v421 = vmul.f32 %v408, %v419
      %v422 = vmul.f32 %v409, %v419
      %v423 = vmul.f32 %v410, %v419
      %v424 = vmul.f32 %v411, %v419
      %v425 = vmul.f32 %v412, %v419
      %v426 = vmul.f32 %v413, %v419
      %v427 = vmul.f32 %v414, %v419
      %v428 = vadd.f32 %v399, %v420
      %v429 = vadd.f32 %v400, %v421
      %v430 = vadd.f32 %v401, %v422
      %v431 = vadd.f32 %v402, %v423
      %v432 = vadd.f32 %v403, %v424
      %v433 = vadd.f32 %v404, %v425
      %v434 = vadd.f32 %v405, %v426
      %v435 = vadd.f32 %v406, %v427
      %v436 = vld [vmem:[%s2] sm:$0x1]
      %v438 = vlaneseq
      %v439 = vshrl.u32 %v438, 7
      %v440 = vsub.s32 0, %v439
      %v441 = vrot.slane %v436, %v440
      %v443 = vadd.f32 %v428, %v441
      %v444 = vadd.f32 %v429, %v441
      %v445 = vadd.f32 %v430, %v441
      %v446 = vadd.f32 %v431, %v441
      %v447 = vadd.f32 %v432, %v441
      %v448 = vadd.f32 %v433, %v441
      %v449 = vadd.f32 %v434, %v441
      %v450 = vadd.f32 %v435, %v441
      %vm451 = vcmask 261120
      %452 = vst.msk [vmem:[%s170] sm:$0xff] %vm451, %v443
      %453 = vst.msk [vmem:[%s170 + $0x8] sm:$0xff] %vm451, %v444
      %454 = vst.msk [vmem:[%s170 + $0x10] sm:$0xff] %vm451, %v445
      %455 = vst.msk [vmem:[%s170 + $0x18] sm:$0xff] %vm451, %v446
      %456 = vst.msk [vmem:[%s170 + $0x20] sm:$0xff] %vm451, %v447
      %457 = vst.msk [vmem:[%s170 + $0x28] sm:$0xff] %vm451, %v448
      %458 = vst.msk [vmem:[%s170 + $0x30] sm:$0xff] %vm451, %v449
      %459 = vst.msk [vmem:[%s170 + $0x38] sm:$0xff] %vm451, %v450
      %p460 = scmp.lt.s32.totalorder %s14, 1
      %s461 = scalar_select %p460, %s14, 1
      %s462 = smul.addr %s461, 8
      %s463 = smul.addr %s462, 8
      %s464 = scalar_lea.vmem %s3, %s463
      // Predicated region
      $region33: #{attention_forward.4} parent=31 // pred_check
        %p465 = pneg %p100
      $region34: #{attention_forward.4} parent=31 // pred_check_branch
        %467 = sbr.rel (%p465) target = $region36
      $region35: #{attention_forward.4} parent=31 // pred_region
        _
      $region36: #{attention_forward.4} parent=31 // pred_fallthru
        _
    $region32: #{attention_forward.4} parent=5 // pred_fallthru
      _
    %p468 = scmp.le.s32.totalorder 2, %s9
    // Predicated region
    $region37: #{attention_forward.4} parent=5 // pred_check
      %p469 = pneg %p468
    $region38: #{attention_forward.4} parent=5 // pred_check_branch
      %471 = sbr.rel (%p469) target = $region40
    $region39: #{attention_forward.4} parent=5 // pred_region
      %s472 = ssub.s32 %s9, 2
      // Predicated region
      $region41: #{attention_forward.4} parent=39 // pred_check
        %p473 = pneg %p106
      $region42: #{attention_forward.4} parent=39 // pred_check_branch
        %475 = sbr.rel (%p473) target = $region44
      $region43: #{attention_forward.4} parent=39 // pred_region
        %p476 = scmp.lt.s32.totalorder %s15, 1
        %s477 = scalar_select %p476, %s15, 1
        %s478 = smul.addr %s477, 8
        %s479 = smul.addr %s478, 8
        %s480 = scalar_lea.vmem %s3, %s479
      $region44: #{attention_forward.4} parent=39 // pred_fallthru
        _
    $region40: #{attention_forward.4} parent=5 // pred_fallthru
      _
  $region6: #{attention_forward.4} parent=0 // loop_footer
    %s13 = sadd.s32 1, %s9
  $region7: #{attention_forward.4} parent=0 // loop_footer_branch
    %8 = sbr.rel target = $region3
  $region8: #{attention_forward.4} parent=0 // loop_exit
    _

</llo_original>
